<compile_context>
chip_gen: v7x
topology: tpu7x:2x2x1
jax: 0.10.0
libtpu: 0.0.40
codegen_flags: <defaults>
</compile_context>

<pallas_src>
import numpy as np
from numpy import pi, sin, cos, tan, arcsin, arctan
from functools import lru_cache, partial

import jax
import jax.numpy as jnp
from jax.experimental import pallas as pl
from jax.experimental.pallas import tpu as pltpu


# Set to jnp.float32 for bit-level parity with the f32 PyTorch reference.
# bf16 MXU inputs give ~1e-3 relative error but halve the dominant HBM traffic.
SPHERE_POOL_COMPUTE_DTYPE = jnp.bfloat16


def _cdiv(a, b):
    return -(-a // b)


def _round_up(a, b):
    return _cdiv(a, b) * b


# ----------------------------------------------------------------------------
# Sphere sampling pattern (verbatim numpy math from the PyTorch module)
# ----------------------------------------------------------------------------
@lru_cache(None)
def get_relative_positions(w, h):
    d_phi = pi / h
    d_theta = 2 * pi / w
    return np.array(
        [[[-tan(d_theta), 1 / cos(d_theta) * tan(d_phi)],
          [0, tan(d_phi)],
          [tan(d_theta), 1 / cos(d_theta) * tan(d_phi)]],
         [[-tan(d_theta), 0],
          [0.5, 0.5],
          [tan(d_theta), 0]],
         [[-tan(d_theta), -1 / cos(d_theta) * tan(d_phi)],
          [0, -tan(d_phi)],
          [tan(d_theta), -1 / cos(d_theta) * tan(d_phi)]]])


@lru_cache(None)
def get_absolute_positions(h, w, center_x, center_y):
    relative_positions = get_relative_positions(w, h)
    x = relative_positions[..., 0]
    y = relative_positions[..., 1]
    rho = np.sqrt(x ** 2 + y ** 2)
    v = arctan(rho)
    offset = 0.1
    center_theta = (center_x + offset) * 2 * pi / w - pi
    center_phi = pi / 2 - (center_y + offset) * pi / h
    phi = arcsin(cos(v) * sin(center_phi) + y * sin(v) * cos(center_phi) / rho)
    theta = center_theta + arctan(
        x * sin(v) / (rho * cos(center_phi) * cos(v) - y * sin(center_phi) * sin(v)))
    img_x = ((theta + pi) * w / pi / 2 - offset) % w
    img_y = (pi / 2 - phi) * h / pi - offset
    absolute_positions = np.stack([img_x, img_y], axis=-1)
    absolute_positions[1, 1] = (center_x, center_y)
    return absolute_positions


@lru_cache(None)
def kernel_sampling_pattern(h, w, stride):
    pattern = np.array([[get_absolute_positions(h, w, x, y)
                         for y in range(0, h, stride)]
                        for x in range(0, w, stride)])
    pattern[..., 0] = pattern[..., 0] * 2 / w - 1
    pattern[..., 1] = pattern[..., 1] * 2 / h - 1
    pattern = pattern.transpose(0, 2, 1, 3, 4)
    s = pattern.shape
    pattern = pattern.reshape(1, s[0] * s[1], s[2] * s[3], 2)
    return pattern.copy()


# ----------------------------------------------------------------------------
# Host-side construction of the bilinear interpolation matrices.
# M[k][q, p] = bilinear weight of input pixel q (= y*W + x) contributing to
# pooled output location p (= (i_out//3)*H_s + (j_out//3)) at 3x3 window
# offset k (= (i_out%3)*3 + (j_out%3)).  Zeros-padding == omitted entries.
# ----------------------------------------------------------------------------
@lru_cache(None)
def build_interp_matrices(H, W, stride):
    grid = kernel_sampling_pattern(H, W, stride)[0]   # (Ho, Wo, 2), Ho=3*W_s, Wo=3*H_s
    Ho, Wo, _ = grid.shape
    W_s, H_s = Ho // 3, Wo // 3
    P, Q = W_s * H_s, H * W
    M = np.zeros((9, Q, P), dtype=np.float32)

    gx, gy = grid[..., 0], grid[..., 1]
    # grid_sample, align_corners=False: unnormalize  pix = ((c + 1) * size - 1) / 2
    ix = ((gx + 1.0) * W - 1.0) / 2.0
    iy = ((gy + 1.0) * H - 1.0) / 2.0
    ix0 = np.floor(ix).astype(np.int64)
    iy0 = np.floor(iy).astype(np.int64)
    wx1 = ix - ix0
    wy1 = iy - iy0

    for i_out in range(Ho):
        for j_out in range(Wo):
            p = (i_out // 3) * H_s + (j_out // 3)
            k = (i_out % 3) * 3 + (j_out % 3)
            for dx, wx in ((0, 1.0 - wx1[i_out, j_out]), (1, wx1[i_out, j_out])):
                for dy, wy in ((0, 1.0 - wy1[i_out, j_out]), (1, wy1[i_out, j_out])):
                    xi = ix0[i_out, j_out] + dx
                    yi = iy0[i_out, j_out] + dy
                    if 0 <= xi < W and 0 <= yi < H:
                        M[k, yi * W + xi, p] += wx * wy
    assert np.isfinite(M).all(), "non-finite bilinear weights in sphere pattern"
    return M


# ----------------------------------------------------------------------------
# Chip capabilities / tiling selection
# ----------------------------------------------------------------------------
@lru_cache(None)
def _chip_caps():
    """(vmem_capacity_bytes, mxu_rows, n_tensorcores) with safe fallbacks."""
    vmem_cap = 64 << 20                     # conservative default (v7x per-TC)
    try:
        info = pltpu.get_tpu_info()
        vmem_cap = int(getattr(info, "vmem_capacity_bytes", vmem_cap))
    except Exception:
        pass
    vmem_cap = max(32 << 20, min(vmem_cap, 128 << 20))
    kind = ""
    try:
        kind = jax.devices()[0].device_kind.lower()
    except Exception:
        pass
    n_cores = 2 if "v7" in kind else 1
    mxu_rows = 128 if any(v in kind for v in ("v2", "v3", "v4", "v5")) else 256
    return vmem_cap, mxu_rows, n_cores


def _vmem_need_bytes(tp, tq, tbc, m_bytes, x_bytes):
    """Pipelined working set: double-buffered M/x/out tiles + the (TBC, 9*TP)
    f32 matmul-result / accumulator slab (previously omitted)."""
    return (2 * tq * 9 * tp * m_bytes
            + 2 * tbc * tq * x_bytes
            + 2 * tbc * tp * 4
            + tbc * 9 * tp * 4)


def _choose_tiling(Q, P_pad, tbc, m_bytes, x_bytes, budget, min_p_tiles):
    """Pick (TP, npt, TQ, nq).  Prefer a single sweep of the contraction axis
    (nq == 1); fall back to splitting Q into a reduction grid axis with a VMEM
    accumulator when even TP=128 does not fit the budget (large H*W on v7x)."""
    n128 = P_pad // 128
    tps = [128 * d for d in range(n128, 0, -1) if n128 % d == 0]   # descending
    want = min(min_p_tiles, n128)
    pref = [tp for tp in tps if P_pad // tp >= want] or tps
    for tp in pref:
        if _vmem_need_bytes(tp, Q, tbc, m_bytes, x_bytes) <= budget:
            return tp, P_pad // tp, Q, 1
    # Contraction-axis split: TP=128, TQ = largest multiple of 128 that fits.
    tp = 128
    tq = 128
    for mult in range(_cdiv(Q, 128), 0, -1):
        cand = 128 * mult
        if _vmem_need_bytes(tp, cand, tbc, m_bytes, x_bytes) <= budget:
            tq = cand
            break
    nq = _cdiv(Q, tq)
    if nq <= 1:
        return tp, P_pad // tp, Q, 1
    return tp, P_pad // tp, tq, nq


@lru_cache(None)
def _fused_interp_matrix(H, W, stride, tp, q_pad, dtype_name):
    """Fused, P-padded, P-tiled (and optionally Q-padded) RHS on device.
    Cached so the O(Ho*Wo) python build and the HBM upload happen once."""
    M9 = build_interp_matrices(H, W, stride)          # (9, Q, P) f32, read-only
    nk, Q, P = M9.shape
    P_pad = _round_up(P, 128)
    npt = P_pad // tp
    if P_pad != P or q_pad != Q:
        M9 = np.pad(M9, ((0, 0), (0, q_pad - Q), (0, P_pad - P)))
    # [k, q, j, t] -> [q, j, k, t]: per P-tile j the 9*tp columns are the
    # k-major concat of M9[k][:, j*tp:(j+1)*tp]  -> one fused lane-dense RHS.
    Mf = (M9.reshape(nk, q_pad, npt, tp)
             .transpose(1, 2, 0, 3)
             .reshape(q_pad, npt * nk * tp))
    # TODO(synk): exploit the <=4-nonzeros-per-column structure of M (banded Q
    # tiling with scalar-prefetched band offsets) for large H*W; the dense M is
    # pure HBM bandwidth and wasted MXU work there.
    return jnp.asarray(Mf, dtype=jnp.dtype(dtype_name))


# ----------------------------------------------------------------------------
# Pallas kernels
# ----------------------------------------------------------------------------
def _max_over_k(y, tp, nk):
    out = y[:, 0:tp]
    for k in range(1, nk):                     # static, lane-aligned slices
        out = jnp.maximum(out, y[:, k * tp:(k + 1) * tp])
    return out


def sphere_pool_kernel(x_ref, m_ref, o_ref, *, tp, nk=9):
    # One fused MXU matmul (f32 accumulation) + 8 lane-aligned maxima.
    y = jnp.dot(x_ref[...], m_ref[...], preferred_element_type=jnp.float32)
    o_ref[...] = _max_over_k(y, tp, nk).astype(o_ref.dtype)


def sphere_pool_kernel_qsplit(x_ref, m_ref, o_ref, acc_ref, *, tp, nk=9):
    # Contraction axis split across the last ('arbitrary') grid dim.
    q = pl.program_id(2)

    @pl.when(q == 0)
    def _():
        acc_ref[...] = jnp.zeros_like(acc_ref)

    acc_ref[...] += jnp.dot(x_ref[...], m_ref[...],
                            preferred_element_type=jnp.float32)

    @pl.when(q == pl.num_programs(2) - 1)
    def _():
        o_ref[...] = _max_over_k(acc_ref[...], tp, nk).astype(o_ref.dtype)


# ----------------------------------------------------------------------------
# Wrapper
# ----------------------------------------------------------------------------
def sphere_pool(x, stride=1, compute_dtype=None):
    if compute_dtype is None:
        compute_dtype = SPHERE_POOL_COMPUTE_DTYPE
    compute_dtype = jnp.dtype(compute_dtype)
    m_bytes = x_bytes = compute_dtype.itemsize

    B, C, H, W = x.shape
    BC, Q = B * C, H * W
    W_s = len(range(0, W, stride))
    H_s = len(range(0, H, stride))
    P = W_s * H_s
    P_pad = _round_up(P, 128)
    out_dtype = x.dtype

    vmem_cap, mxu_rows, n_cores = _chip_caps()
    TBC = BC if BC <= mxu_rows else mxu_rows        # full dim, or multiple of 8
    n_bc = _cdiv(BC, TBC)
    budget = min(48 << 20, vmem_cap * 3 // 8)       # ~24 MiB on v7x, 48 MiB otherwise
    min_p_tiles = 2 if (n_cores >= 2 and n_bc < 2) else 1   # feed both v7x TCs

    TP, npt, TQ, nq = _choose_tiling(Q, P_pad, TBC, m_bytes, x_bytes,
                                     budget, min_p_tiles)
    Q_pad = TQ * nq

    Mf = _fused_interp_matrix(H, W, stride, TP, Q_pad, compute_dtype.name)

    x_flat = x.reshape(BC, Q).astype(compute_dtype)
    if Q_pad != Q:
        x_flat = jnp.pad(x_flat, ((0, 0), (0, Q_pad - Q)))

    m_total = Q_pad * 9 * P_pad * m_bytes
    x_total = BC * Q_pad * x_bytes

    if nq == 1:
        kern = partial(sphere_pool_kernel, tp=TP)
        scratch = []
        dims = ("parallel", "parallel")
        bc_outer_bytes = n_bc * m_total + x_total    # M re-streamed per BC tile
        p_outer_bytes = m_total + npt * x_total      # M fetched once, x re-streamed
        if bc_outer_bytes <= p_outer_bytes:
            grid = (n_bc, npt)
            in_specs = [pl.BlockSpec((TBC, Q_pad), lambda i, j: (i, 0)),
                        pl.BlockSpec((Q_pad, 9 * TP), lambda i, j: (0, j))]
            out_specs = pl.BlockSpec((TBC, TP), lambda i, j: (i, j))
            stream_bytes = bc_outer_bytes
        else:
            # BC is the fast axis: the big M tile stays resident across BC tiles.
            grid = (npt, n_bc)
            in_specs = [pl.BlockSpec((TBC, Q_pad), lambda j, i: (i, 0)),
                        pl.BlockSpec((Q_pad, 9 * TP), lambda j, i: (0, j))]
            out_specs = pl.BlockSpec((TBC, TP), lambda j, i: (i, j))
            stream_bytes = p_outer_bytes
    else:
        kern = partial(sphere_pool_kernel_qsplit, tp=TP)
        scratch = [pltpu.VMEM((TBC, 9 * TP), jnp.float32)]
        dims = ("parallel", "parallel", "arbitrary")
        grid = (n_bc, npt, nq)
        in_specs = [pl.BlockSpec((TBC, TQ), lambda i, j, q: (i, q)),
                    pl.BlockSpec((TQ, 9 * TP), lambda i, j, q: (q, j))]
        out_specs = pl.BlockSpec((TBC, TP), lambda i, j, q: (i, j))
        stream_bytes = n_bc * m_total + npt * x_total

    need = _vmem_need_bytes(TP, TQ, TBC, m_bytes, x_bytes)
    cp_kwargs = dict(dimension_semantics=dims)
    if need > (12 << 20):
        limit = max(need * 3 // 2, 16 << 20)
        cp_kwargs["vmem_limit_bytes"] = int(min(limit, vmem_cap * 9 // 10))

    cost = pl.CostEstimate(
        flops=2 * BC * Q_pad * 9 * P_pad,
        transcendentals=0,
        bytes_accessed=int(stream_bytes + BC * P_pad * np.dtype(out_dtype).itemsize),
    )

    out = pl.pallas_call(
        kern,
        out_shape=jax.ShapeDtypeStruct((BC, P_pad), out_dtype),
        grid_spec=pltpu.PrefetchScalarGridSpec(
            num_scalar_prefetch=0,
            grid=grid,
            in_specs=in_specs,
            out_specs=out_specs,
            scratch_shapes=scratch,
        ),
        compiler_params=pltpu.CompilerParams(**cp_kwargs),
        cost_estimate=cost,
    )(x_flat, Mf)

    if P_pad != P:
        out = out[:, :P]
    # PyTorch output shape: (B, C, 3*W_s // 3, 3*H_s // 3) = (B, C, W_s, H_s)
    return out.reshape(B, C, W_s, H_s)


if __name__ == "__main__":
    key = jax.random.PRNGKey(0)
    x = jax.random.normal(key, (2, 4, 16, 16), dtype=jnp.float32)
    out = sphere_pool(x, stride=1)
    out = jax.block_until_ready(out)
    assert out.shape == (2, 4, 16, 16) and out.dtype == jnp.float32

    # Self-check against the host-side interpolation-matrix math (loose tol
    # covers the bf16 compute path).
    M9 = build_interp_matrices(16, 16, 1)                       # (9, Q, P)
    xf = np.asarray(x, dtype=np.float32).reshape(8, 256)
    sampled = np.einsum('bq,kqp->kbp', xf, M9)                  # (9, BC, P)
    ref = sampled.max(axis=0).reshape(2, 4, 16, 16)
    np.testing.assert_allclose(np.asarray(out, dtype=np.float32), ref,
                               atol=3e-2, rtol=3e-2)
    print("KERNEL_OK")
</pallas_src>

<mosaic_0001>
module attributes {stable_mosaic.version = 11 : i64} {
  func.func @sphere_pool_kernel(%arg0: i32, %arg1: i32, %arg2: memref<8x256xbf16, #tpu.memory_space<vmem>>, %arg3: memref<256x2304xbf16, #tpu.memory_space<vmem>>, %arg4: memref<8x256xf32, #tpu.memory_space<vmem>>) attributes {dimension_semantics = [#tpu.dimension_semantics<parallel>, #tpu.dimension_semantics<parallel>], iteration_bounds = array<i64: 1, 1>, scalar_prefetch = 0 : i64, scratch_operands = 0 : i64, tpu.core_type = #tpu.core_type<tc>, window_params = [{transform_indices = @transform_0, window_bounds = array<i64: 8, 256>}, {transform_indices = @transform_1, window_bounds = array<i64: 256, 2304>}, {transform_indices = @transform_2, window_bounds = array<i64: 8, 256>}]} {
    %c0 = arith.constant 0 : index
    %c0_0 = arith.constant 0 : index
    %0 = vector.load %arg2[%c0, %c0_0] : memref<8x256xbf16, #tpu.memory_space<vmem>>, vector<8x256xbf16>
    %c0_1 = arith.constant 0 : index
    %c0_2 = arith.constant 0 : index
    %1 = vector.load %arg3[%c0_1, %c0_2] : memref<256x2304xbf16, #tpu.memory_space<vmem>>, vector<256x2304xbf16>
    %cst = arith.constant dense<0.000000e+00> : vector<8x2304xf32>
    %2 = tpu.matmul %0, %1, %cst {dimension_numbers = #tpu.dot_dimension_numbers<[1], [0], [0], [1], [0, 0, 1, 1], [], []>} : vector<8x256xbf16>, vector<256x2304xbf16>, vector<8x2304xf32> -> vector<8x2304xf32>
    %3 = vector.extract_strided_slice %2 {offsets = [0, 0], sizes = [8, 256], strides = [1, 1]} : vector<8x2304xf32> to vector<8x256xf32>
    %4 = vector.extract_strided_slice %2 {offsets = [0, 256], sizes = [8, 256], strides = [1, 1]} : vector<8x2304xf32> to vector<8x256xf32>
    %5 = arith.maximumf %3, %4 : vector<8x256xf32>
    %6 = vector.extract_strided_slice %2 {offsets = [0, 512], sizes = [8, 256], strides = [1, 1]} : vector<8x2304xf32> to vector<8x256xf32>
    %7 = arith.maximumf %5, %6 : vector<8x256xf32>
    %8 = vector.extract_strided_slice %2 {offsets = [0, 768], sizes = [8, 256], strides = [1, 1]} : vector<8x2304xf32> to vector<8x256xf32>
    %9 = arith.maximumf %7, %8 : vector<8x256xf32>
    %10 = vector.extract_strided_slice %2 {offsets = [0, 1024], sizes = [8, 256], strides = [1, 1]} : vector<8x2304xf32> to vector<8x256xf32>
    %11 = arith.maximumf %9, %10 : vector<8x256xf32>
    %12 = vector.extract_strided_slice %2 {offsets = [0, 1280], sizes = [8, 256], strides = [1, 1]} : vector<8x2304xf32> to vector<8x256xf32>
    %13 = arith.maximumf %11, %12 : vector<8x256xf32>
    %14 = vector.extract_strided_slice %2 {offsets = [0, 1536], sizes = [8, 256], strides = [1, 1]} : vector<8x2304xf32> to vector<8x256xf32>
    %15 = arith.maximumf %13, %14 : vector<8x256xf32>
    %16 = vector.extract_strided_slice %2 {offsets = [0, 1792], sizes = [8, 256], strides = [1, 1]} : vector<8x2304xf32> to vector<8x256xf32>
    %17 = arith.maximumf %15, %16 : vector<8x256xf32>
    %18 = vector.extract_strided_slice %2 {offsets = [0, 2048], sizes = [8, 256], strides = [1, 1]} : vector<8x2304xf32> to vector<8x256xf32>
    %19 = arith.maximumf %17, %18 : vector<8x256xf32>
    %c0_3 = arith.constant 0 : index
    %c0_4 = arith.constant 0 : index
    %20 = vector.load %arg4[%c0_3, %c0_4] : memref<8x256xf32, #tpu.memory_space<vmem>>, vector<8x256xf32>
    tpu.vector_store %arg4[%c0_3, %c0_4], %19 {strides = array<i32>} : memref<8x256xf32, #tpu.memory_space<vmem>>, vector<8x256xf32>,
    return
  }
  func.func @transform_0(%arg0: i32, %arg1: i32) -> (i32, i32) {
    %c0_i32 = arith.constant 0 : i32
    %c0_i32_0 = arith.constant 0 : i32
    return %arg0, %c0_i32 : i32, i32
  }
  func.func @transform_1(%arg0: i32, %arg1: i32) -> (i32, i32) {
    %c0_i32 = arith.constant 0 : i32
    %c0_i32_0 = arith.constant 0 : i32
    return %c0_i32, %arg1 : i32, i32
  }
  func.func @transform_2(%arg0: i32, %arg1: i32) -> (i32, i32) {
    %c0_i32 = arith.constant 0 : i32
    return %arg0, %arg1 : i32, i32
  }
}

</mosaic_0001>

<llo_original>
// kernel: tpu_custom_call.1
$region0: #{tpu_custom_call.1}
  #allocation0 [shape = 'u32[]', space=smem, size = 0x4, offset = 0x4, fixed_abs, tag = 'smem constant byte address 0x4 - core index']
  #allocation1 [shape = 'u32[144,128]{1,0:T(1,128)}', space=vmem, size = 0x12000, scoped, tag = 'internal scratch']
  %s0 = inlined_call_operand.hbm [shape: bf16[8,256], index: 0, kind: input, shape index: {}]
  %s1 = inlined_call_operand.hbm [shape: bf16[256,2304], index: 1, kind: input, shape index: {}]
  %s2 = inlined_call_operand.hbm [shape: f32[8,256], index: 2, kind: output, shape index: {}]
  %s3 = sld [smem:[#allocation0]]
  $region26: #{tpu_custom_call.1} parent=0
    _
  %s5 = ssub.s32 1, %s3
  %s6 = scalar_select 0, %s5, %s3
  $region1: #{tpu_custom_call.1} parent=0
    #allocation2 [shape = 'u8[4096]{0}', space=vmem, size = 0x1000, scoped, tag = 'input window, operand 0, single buffered']
    #allocation3 [shape = 's32[1]{0}', space=sflag, size = 0x4, scoped, tag = 'scoped memory for tpu_custom_call.1']
    #allocation4 [shape = 's32[1]{0}', space=sflag, size = 0x4, scoped, tag = 'scoped memory for tpu_custom_call.1']
    #allocation5 [shape = 'u8[1179648]{0}', space=vmem, size = 0x120000, scoped, tag = 'input window, operand 1, single buffered']
    #allocation6 [shape = 's32[1]{0}', space=sflag, size = 0x4, scoped, tag = 'scoped memory for tpu_custom_call.1']
    #allocation7 [shape = 'u8[8192]{0}', space=vmem, size = 0x2000, scoped, tag = 'output window, operand 0, single buffered']
    %7 = vsyncpa [#allocation3], 0
    %8 = vsyncpa [#allocation6], 0
    %9 = vsyncpa [#allocation4], 0
    // Predicated region
    $region2: #{tpu_custom_call.1} parent=1 // pred_check
      _
    $region3: #{tpu_custom_call.1} parent=1 // pred_check_branch
      %11 = sbr.rel (0) target = $region5
    $region4: #{tpu_custom_call.1} parent=1 // pred_region
      %s13 = ssub.s32 128, 128
      %14 = vsyncadd [#allocation3], %s13
      %s16 = sshll.u32 [#allocation2], 4
      %s17 = int_to_ptr.vmem [resolvable:$true] %s16
      %19 = dma.hbm_to_vmem [thread:$0]  %s0, 128, %s17, [#allocation3]
    $region5: #{tpu_custom_call.1} parent=1 // pred_fallthru
      _
    // Predicated region
    $region6: #{tpu_custom_call.1} parent=1 // pred_check
      _
    $region7: #{tpu_custom_call.1} parent=1 // pred_check_branch
      %21 = sbr.rel (0) target = $region9
    $region8: #{tpu_custom_call.1} parent=1 // pred_region
      %s23 = ssub.s32 36864, 36864
      %24 = vsyncadd [#allocation6], %s23
      %s25 = sshll.u32 [#allocation5], 4
      %s26 = int_to_ptr.vmem [resolvable:$true] %s25
      %31 = dma.hbm_to_vmem [thread:$0]  %s1, 36864, %s26, [#allocation6], 1152, 1152, 72
    $region9: #{tpu_custom_call.1} parent=1 // pred_fallthru
      _
    // Predicated region
    $region10: #{tpu_custom_call.1} parent=1 // pred_check
      _
    $region11: #{tpu_custom_call.1} parent=1 // pred_check_branch
      %33 = sbr.rel (0) target = $region13
    $region12: #{tpu_custom_call.1} parent=1 // pred_region
      %34 = dma.done [#allocation3], 128
    $region13: #{tpu_custom_call.1} parent=1 // pred_fallthru
      _
    // Predicated region
    $region14: #{tpu_custom_call.1} parent=1 // pred_check
      _
    $region15: #{tpu_custom_call.1} parent=1 // pred_check_branch
      %36 = sbr.rel (0) target = $region17
    $region16: #{tpu_custom_call.1} parent=1 // pred_region
      %37 = dma.done [#allocation6], 36864
    $region17: #{tpu_custom_call.1} parent=1 // pred_fallthru
      _
    %v38 = vld [vmem:[#allocation2] sm:$0xff]
    %v39 = vld [vmem:[#allocation5] sm:$0xff]
    %v40 = vld [vmem:[#allocation5 + $0x8] sm:$0xff]
    %v41 = vld [vmem:[#allocation5 + $0x10] sm:$0xff]
    %v42 = vld [vmem:[#allocation5 + $0x18] sm:$0xff]
    %v43 = vld [vmem:[#allocation5 + $0x20] sm:$0xff]
    %v44 = vld [vmem:[#allocation5 + $0x28] sm:$0xff]
    %v45 = vld [vmem:[#allocation5 + $0x30] sm:$0xff]
    %v46 = vld [vmem:[#allocation5 + $0x38] sm:$0xff]
    %v47 = vld [vmem:[#allocation5 + $0x40] sm:$0xff]
    %v48 = vld [vmem:[#allocation5 + $0x48] sm:$0xff]
    %v49 = vld [vmem:[#allocation5 + $0x50] sm:$0xff]
    %v50 = vld [vmem:[#allocation5 + $0x58] sm:$0xff]
    %v51 = vld [vmem:[#allocation5 + $0x60] sm:$0xff]
    %v52 = vld [vmem:[#allocation5 + $0x68] sm:$0xff]
    %v53 = vld [vmem:[#allocation5 + $0x70] sm:$0xff]
    %v54 = vld [vmem:[#allocation5 + $0x78] sm:$0xff]
    %v55 = vld [vmem:[#allocation5 + $0x80] sm:$0xff]
    %v56 = vld [vmem:[#allocation5 + $0x88] sm:$0xff]
    %v57 = vld [vmem:[#allocation5 + $0x90] sm:$0xff]
    %v58 = vld [vmem:[#allocation5 + $0x98] sm:$0xff]
    %v59 = vld [vmem:[#allocation5 + $0xa0] sm:$0xff]
    %v60 = vld [vmem:[#allocation5 + $0xa8] sm:$0xff]
    %v61 = vld [vmem:[#allocation5 + $0xb0] sm:$0xff]
    %v62 = vld [vmem:[#allocation5 + $0xb8] sm:$0xff]
    %v63 = vld [vmem:[#allocation5 + $0xc0] sm:$0xff]
    %v64 = vld [vmem:[#allocation5 + $0xc8] sm:$0xff]
    %v65 = vld [vmem:[#allocation5 + $0xd0] sm:$0xff]
    %v66 = vld [vmem:[#allocation5 + $0xd8] sm:$0xff]
    %v67 = vld [vmem:[#allocation5 + $0xe0] sm:$0xff]
    %v68 = vld [vmem:[#allocation5 + $0xe8] sm:$0xff]
    %v69 = vld [vmem:[#allocation5 + $0xf0] sm:$0xff]
    %v70 = vld [vmem:[#allocation5 + $0xf8] sm:$0xff]
    %v71 = vld [vmem:[#allocation5 + $0x100] sm:$0xff]
    %v72 = vld [vmem:[#allocation5 + $0x108] sm:$0xff]
    %v73 = vld [vmem:[#allocation5 + $0x110] sm:$0xff]
    %v74 = vld [vmem:[#allocation5 + $0x118] sm:$0xff]
    %v75 = vld [vmem:[#allocation5 + $0x120] sm:$0xff]
    %v76 = vld [vmem:[#allocation5 + $0x128] sm:$0xff]
    %v77 = vld [vmem:[#allocation5 + $0x130] sm:$0xff]
    %v78 = vld [vmem:[#allocation5 + $0x138] sm:$0xff]
    %v79 = vld [vmem:[#allocation5 + $0x140] sm:$0xff]
    %v80 = vld [vmem:[#allocation5 + $0x148] sm:$0xff]
    %v81 = vld [vmem:[#allocation5 + $0x150] sm:$0xff]
    %v82 = vld [vmem:[#allocation5 + $0x158] sm:$0xff]
    %v83 = vld [vmem:[#allocation5 + $0x160] sm:$0xff]
    %v84 = vld [vmem:[#allocation5 + $0x168] sm:$0xff]
    %v85 = vld [vmem:[#allocation5 + $0x170] sm:$0xff]
    %v86 = vld [vmem:[#allocation5 + $0x178] sm:$0xff]
    %v87 = vld [vmem:[#allocation5 + $0x180] sm:$0xff]
    %v88 = vld [vmem:[#allocation5 + $0x188] sm:$0xff]
    %v89 = vld [vmem:[#allocation5 + $0x190] sm:$0xff]
    %v90 = vld [vmem:[#allocation5 + $0x198] sm:$0xff]
    %v91 = vld [vmem:[#allocation5 + $0x1a0] sm:$0xff]
    %v92 = vld [vmem:[#allocation5 + $0x1a8] sm:$0xff]
    %v93 = vld [vmem:[#allocation5 + $0x1b0] sm:$0xff]
    %v94 = vld [vmem:[#allocation5 + $0x1b8] sm:$0xff]
    %v95 = vld [vmem:[#allocation5 + $0x1c0] sm:$0xff]
    %v96 = vld [vmem:[#allocation5 + $0x1c8] sm:$0xff]
    %v97 = vld [vmem:[#allocation5 + $0x1d0] sm:$0xff]
    %v98 = vld [vmem:[#allocation5 + $0x1d8] sm:$0xff]
    %v99 = vld [vmem:[#allocation5 + $0x1e0] sm:$0xff]
    %v100 = vld [vmem:[#allocation5 + $0x1e8] sm:$0xff]
    %v101 = vld [vmem:[#allocation5 + $0x1f0] sm:$0xff]
    %v102 = vld [vmem:[#allocation5 + $0x1f8] sm:$0xff]
    %v103 = vld [vmem:[#allocation5 + $0x200] sm:$0xff]
    %v104 = vld [vmem:[#allocation5 + $0x208] sm:$0xff]
    %v105 = vld [vmem:[#allocation5 + $0x210] sm:$0xff]
    %v106 = vld [vmem:[#allocation5 + $0x218] sm:$0xff]
    %v107 = vld [vmem:[#allocation5 + $0x220] sm:$0xff]
    %v108 = vld [vmem:[#allocation5 + $0x228] sm:$0xff]
    %v109 = vld [vmem:[#allocation5 + $0x230] sm:$0xff]
    %v110 = vld [vmem:[#allocation5 + $0x238] sm:$0xff]
    %v111 = vld [vmem:[#allocation5 + $0x240] sm:$0xff]
    %v112 = vld [vmem:[#allocation5 + $0x248] sm:$0xff]
    %v113 = vld [vmem:[#allocation5 + $0x250] sm:$0xff]
    %v114 = vld [vmem:[#allocation5 + $0x258] sm:$0xff]
    %v115 = vld [vmem:[#allocation5 + $0x260] sm:$0xff]
    %v116 = vld [vmem:[#allocation5 + $0x268] sm:$0xff]
    %v117 = vld [vmem:[#allocation5 + $0x270] sm:$0xff]
    %v118 = vld [vmem:[#allocation5 + $0x278] sm:$0xff]
    %v119 = vld [vmem:[#allocation5 + $0x280] sm:$0xff]
    %v120 = vld [vmem:[#allocation5 + $0x288] sm:$0xff]
    %v121 = vld [vmem:[#allocation5 + $0x290] sm:$0xff]
    %v122 = vld [vmem:[#allocation5 + $0x298] sm:$0xff]
    %v123 = vld [vmem:[#allocation5 + $0x2a0] sm:$0xff]
    %v124 = vld [vmem:[#allocation5 + $0x2a8] sm:$0xff]
    %v125 = vld [vmem:[#allocation5 + $0x2b0] sm:$0xff]
    %v126 = vld [vmem:[#allocation5 + $0x2b8] sm:$0xff]
    %v127 = vld [vmem:[#allocation5 + $0x2c0] sm:$0xff]
    %v128 = vld [vmem:[#allocation5 + $0x2c8] sm:$0xff]
    %v129 = vld [vmem:[#allocation5 + $0x2d0] sm:$0xff]
    %v130 = vld [vmem:[#allocation5 + $0x2d8] sm:$0xff]
    %v131 = vld [vmem:[#allocation5 + $0x2e0] sm:$0xff]
    %v132 = vld [vmem:[#allocation5 + $0x2e8] sm:$0xff]
    %v133 = vld [vmem:[#allocation5 + $0x2f0] sm:$0xff]
    %v134 = vld [vmem:[#allocation5 + $0x2f8] sm:$0xff]
    %v135 = vld [vmem:[#allocation5 + $0x300] sm:$0xff]
    %v136 = vld [vmem:[#allocation5 + $0x308] sm:$0xff]
    %v137 = vld [vmem:[#allocation5 + $0x310] sm:$0xff]
    %v138 = vld [vmem:[#allocation5 + $0x318] sm:$0xff]
    %v139 = vld [vmem:[#allocation5 + $0x320] sm:$0xff]
    %v140 = vld [vmem:[#allocation5 + $0x328] sm:$0xff]
    %v141 = vld [vmem:[#allocation5 + $0x330] sm:$0xff]
    %v142 = vld [vmem:[#allocation5 + $0x338] sm:$0xff]
    %v143 = vld [vmem:[#allocation5 + $0x340] sm:$0xff]
    %v144 = vld [vmem:[#allocation5 + $0x348] sm:$0xff]
    %v145 = vld [vmem:[#allocation5 + $0x350] sm:$0xff]
    %v146 = vld [vmem:[#allocation5 + $0x358] sm:$0xff]
    %v147 = vld [vmem:[#allocation5 + $0x360] sm:$0xff]
    %v148 = vld [vmem:[#allocation5 + $0x368] sm:$0xff]
    %v149 = vld [vmem:[#allocation5 + $0x370] sm:$0xff]
    %v150 = vld [vmem:[#allocation5 + $0x378] sm:$0xff]
    %v151 = vld [vmem:[#allocation5 + $0x380] sm:$0xff]
    %v152 = vld [vmem:[#allocation5 + $0x388] sm:$0xff]
    %v153 = vld [vmem:[#allocation5 + $0x390] sm:$0xff]
    %v154 = vld [vmem:[#allocation5 + $0x398] sm:$0xff]
    %v155 = vld [vmem:[#allocation5 + $0x3a0] sm:$0xff]
    %v156 = vld [vmem:[#allocation5 + $0x3a8] sm:$0xff]
    %v157 = vld [vmem:[#allocation5 + $0x3b0] sm:$0xff]
    %v158 = vld [vmem:[#allocation5 + $0x3b8] sm:$0xff]
    %v159 = vld [vmem:[#allocation5 + $0x3c0] sm:$0xff]
    %v160 = vld [vmem:[#allocation5 + $0x3c8] sm:$0xff]
    %v161 = vld [vmem:[#allocation5 + $0x3d0] sm:$0xff]
    %v162 = vld [vmem:[#allocation5 + $0x3d8] sm:$0xff]
    %v163 = vld [vmem:[#allocation5 + $0x3e0] sm:$0xff]
    %v164 = vld [vmem:[#allocation5 + $0x3e8] sm:$0xff]
    %v165 = vld [vmem:[#allocation5 + $0x3f0] sm:$0xff]
    %v166 = vld [vmem:[#allocation5 + $0x3f8] sm:$0xff]
    %v167 = vld [vmem:[#allocation5 + $0x400] sm:$0xff]
    %v168 = vld [vmem:[#allocation5 + $0x408] sm:$0xff]
    %v169 = vld [vmem:[#allocation5 + $0x410] sm:$0xff]
    %v170 = vld [vmem:[#allocation5 + $0x418] sm:$0xff]
    %v171 = vld [vmem:[#allocation5 + $0x420] sm:$0xff]
    %v172 = vld [vmem:[#allocation5 + $0x428] sm:$0xff]
    %v173 = vld [vmem:[#allocation5 + $0x430] sm:$0xff]
    %v174 = vld [vmem:[#allocation5 + $0x438] sm:$0xff]
    %v175 = vld [vmem:[#allocation5 + $0x440] sm:$0xff]
    %v176 = vld [vmem:[#allocation5 + $0x448] sm:$0xff]
    %v177 = vld [vmem:[#allocation5 + $0x450] sm:$0xff]
    %v178 = vld [vmem:[#allocation5 + $0x458] sm:$0xff]
    %v179 = vld [vmem:[#allocation5 + $0x460] sm:$0xff]
    %v180 = vld [vmem:[#allocation5 + $0x468] sm:$0xff]
    %v181 = vld [vmem:[#allocation5 + $0x470] sm:$0xff]
    %v182 = vld [vmem:[#allocation5 + $0x478] sm:$0xff]
    %v183 = vld [vmem:[#allocation5 + $0x480] sm:$0xff]
    %v184 = vld [vmem:[#allocation5 + $0x488] sm:$0xff]
    %v185 = vld [vmem:[#allocation5 + $0x490] sm:$0xff]
    %v186 = vld [vmem:[#allocation5 + $0x498] sm:$0xff]
    %v187 = vld [vmem:[#allocation5 + $0x4a0] sm:$0xff]
    %v188 = vld [vmem:[#allocation5 + $0x4a8] sm:$0xff]
    %v189 = vld [vmem:[#allocation5 + $0x4b0] sm:$0xff]
    %v190 = vld [vmem:[#allocation5 + $0x4b8] sm:$0xff]
    %v191 = vld [vmem:[#allocation5 + $0x4c0] sm:$0xff]
    %v192 = vld [vmem:[#allocation5 + $0x4c8] sm:$0xff]
    %v193 = vld [vmem:[#allocation5 + $0x4d0] sm:$0xff]
    %v194 = vld [vmem:[#allocation5 + $0x4d8] sm:$0xff]
    %v195 = vld [vmem:[#allocation5 + $0x4e0] sm:$0xff]
    %v196 = vld [vmem:[#allocation5 + $0x4e8] sm:$0xff]
    %v197 = vld [vmem:[#allocation5 + $0x4f0] sm:$0xff]
    %v198 = vld [vmem:[#allocation5 + $0x4f8] sm:$0xff]
    %v199 = vld [vmem:[#allocation5 + $0x500] sm:$0xff]
    %v200 = vld [vmem:[#allocation5 + $0x508] sm:$0xff]
    %v201 = vld [vmem:[#allocation5 + $0x510] sm:$0xff]
    %v202 = vld [vmem:[#allocation5 + $0x518] sm:$0xff]
    %v203 = vld [vmem:[#allocation5 + $0x520] sm:$0xff]
    %v204 = vld [vmem:[#allocation5 + $0x528] sm:$0xff]
    %v205 = vld [vmem:[#allocation5 + $0x530] sm:$0xff]
    %v206 = vld [vmem:[#allocation5 + $0x538] sm:$0xff]
    %v207 = vld [vmem:[#allocation5 + $0x540] sm:$0xff]
    %v208 = vld [vmem:[#allocation5 + $0x548] sm:$0xff]
    %v209 = vld [vmem:[#allocation5 + $0x550] sm:$0xff]
    %v210 = vld [vmem:[#allocation5 + $0x558] sm:$0xff]
    %v211 = vld [vmem:[#allocation5 + $0x560] sm:$0xff]
    %v212 = vld [vmem:[#allocation5 + $0x568] sm:$0xff]
    %v213 = vld [vmem:[#allocation5 + $0x570] sm:$0xff]
    %v214 = vld [vmem:[#allocation5 + $0x578] sm:$0xff]
    %v215 = vld [vmem:[#allocation5 + $0x580] sm:$0xff]
    %v216 = vld [vmem:[#allocation5 + $0x588] sm:$0xff]
    %v217 = vld [vmem:[#allocation5 + $0x590] sm:$0xff]
    %v218 = vld [vmem:[#allocation5 + $0x598] sm:$0xff]
    %v219 = vld [vmem:[#allocation5 + $0x5a0] sm:$0xff]
    %v220 = vld [vmem:[#allocation5 + $0x5a8] sm:$0xff]
    %v221 = vld [vmem:[#allocation5 + $0x5b0] sm:$0xff]
    %v222 = vld [vmem:[#allocation5 + $0x5b8] sm:$0xff]
    %v223 = vld [vmem:[#allocation5 + $0x5c0] sm:$0xff]
    %v224 = vld [vmem:[#allocation5 + $0x5c8] sm:$0xff]
    %v225 = vld [vmem:[#allocation5 + $0x5d0] sm:$0xff]
    %v226 = vld [vmem:[#allocation5 + $0x5d8] sm:$0xff]
    %v227 = vld [vmem:[#allocation5 + $0x5e0] sm:$0xff]
    %v228 = vld [vmem:[#allocation5 + $0x5e8] sm:$0xff]
    %v229 = vld [vmem:[#allocation5 + $0x5f0] sm:$0xff]
    %v230 = vld [vmem:[#allocation5 + $0x5f8] sm:$0xff]
    %v231 = vld [vmem:[#allocation5 + $0x600] sm:$0xff]
    %v232 = vld [vmem:[#allocation5 + $0x608] sm:$0xff]
    %v233 = vld [vmem:[#allocation5 + $0x610] sm:$0xff]
    %v234 = vld [vmem:[#allocation5 + $0x618] sm:$0xff]
    %v235 = vld [vmem:[#allocation5 + $0x620] sm:$0xff]
    %v236 = vld [vmem:[#allocation5 + $0x628] sm:$0xff]
    %v237 = vld [vmem:[#allocation5 + $0x630] sm:$0xff]
    %v238 = vld [vmem:[#allocation5 + $0x638] sm:$0xff]
    %v239 = vld [vmem:[#allocation5 + $0x640] sm:$0xff]
    %v240 = vld [vmem:[#allocation5 + $0x648] sm:$0xff]
    %v241 = vld [vmem:[#allocation5 + $0x650] sm:$0xff]
    %v242 = vld [vmem:[#allocation5 + $0x658] sm:$0xff]
    %v243 = vld [vmem:[#allocation5 + $0x660] sm:$0xff]
    %v244 = vld [vmem:[#allocation5 + $0x668] sm:$0xff]
    %v245 = vld [vmem:[#allocation5 + $0x670] sm:$0xff]
    %v246 = vld [vmem:[#allocation5 + $0x678] sm:$0xff]
    %v247 = vld [vmem:[#allocation5 + $0x680] sm:$0xff]
    %v248 = vld [vmem:[#allocation5 + $0x688] sm:$0xff]
    %v249 = vld [vmem:[#allocation5 + $0x690] sm:$0xff]
    %v250 = vld [vmem:[#allocation5 + $0x698] sm:$0xff]
    %v251 = vld [vmem:[#allocation5 + $0x6a0] sm:$0xff]
    %v252 = vld [vmem:[#allocation5 + $0x6a8] sm:$0xff]
    %v253 = vld [vmem:[#allocation5 + $0x6b0] sm:$0xff]
    %v254 = vld [vmem:[#allocation5 + $0x6b8] sm:$0xff]
    %v255 = vld [vmem:[#allocation5 + $0x6c0] sm:$0xff]
    %v256 = vld [vmem:[#allocation5 + $0x6c8] sm:$0xff]
    %v257 = vld [vmem:[#allocation5 + $0x6d0] sm:$0xff]
    %v258 = vld [vmem:[#allocation5 + $0x6d8] sm:$0xff]
    %v259 = vld [vmem:[#allocation5 + $0x6e0] sm:$0xff]
    %v260 = vld [vmem:[#allocation5 + $0x6e8] sm:$0xff]
    %v261 = vld [vmem:[#allocation5 + $0x6f0] sm:$0xff]
    %v262 = vld [vmem:[#allocation5 + $0x6f8] sm:$0xff]
    %v263 = vld [vmem:[#allocation5 + $0x700] sm:$0xff]
    %v264 = vld [vmem:[#allocation5 + $0x708] sm:$0xff]
    %v265 = vld [vmem:[#allocation5 + $0x710] sm:$0xff]
    %v266 = vld [vmem:[#allocation5 + $0x718] sm:$0xff]
    %v267 = vld [vmem:[#allocation5 + $0x720] sm:$0xff]
    %v268 = vld [vmem:[#allocation5 + $0x728] sm:$0xff]
    %v269 = vld [vmem:[#allocation5 + $0x730] sm:$0xff]
    %v270 = vld [vmem:[#allocation5 + $0x738] sm:$0xff]
    %v271 = vld [vmem:[#allocation5 + $0x740] sm:$0xff]
    %v272 = vld [vmem:[#allocation5 + $0x748] sm:$0xff]
    %v273 = vld [vmem:[#allocation5 + $0x750] sm:$0xff]
    %v274 = vld [vmem:[#allocation5 + $0x758] sm:$0xff]
    %v275 = vld [vmem:[#allocation5 + $0x760] sm:$0xff]
    %v276 = vld [vmem:[#allocation5 + $0x768] sm:$0xff]
    %v277 = vld [vmem:[#allocation5 + $0x770] sm:$0xff]
    %v278 = vld [vmem:[#allocation5 + $0x778] sm:$0xff]
    %v279 = vld [vmem:[#allocation5 + $0x780] sm:$0xff]
    %v280 = vld [vmem:[#allocation5 + $0x788] sm:$0xff]
    %v281 = vld [vmem:[#allocation5 + $0x790] sm:$0xff]
    %v282 = vld [vmem:[#allocation5 + $0x798] sm:$0xff]
    %v283 = vld [vmem:[#allocation5 + $0x7a0] sm:$0xff]
    %v284 = vld [vmem:[#allocation5 + $0x7a8] sm:$0xff]
    %v285 = vld [vmem:[#allocation5 + $0x7b0] sm:$0xff]
    %v286 = vld [vmem:[#allocation5 + $0x7b8] sm:$0xff]
    %v287 = vld [vmem:[#allocation5 + $0x7c0] sm:$0xff]
    %v288 = vld [vmem:[#allocation5 + $0x7c8] sm:$0xff]
    %v289 = vld [vmem:[#allocation5 + $0x7d0] sm:$0xff]
    %v290 = vld [vmem:[#allocation5 + $0x7d8] sm:$0xff]
    %v291 = vld [vmem:[#allocation5 + $0x7e0] sm:$0xff]
    %v292 = vld [vmem:[#allocation5 + $0x7e8] sm:$0xff]
    %v293 = vld [vmem:[#allocation5 + $0x7f0] sm:$0xff]
    %v294 = vld [vmem:[#allocation5 + $0x7f8] sm:$0xff]
    %v295 = vld [vmem:[#allocation5 + $0x800] sm:$0xff]
    %v296 = vld [vmem:[#allocation5 + $0x808] sm:$0xff]
    %v297 = vld [vmem:[#allocation5 + $0x810] sm:$0xff]
    %v298 = vld [vmem:[#allocation5 + $0x818] sm:$0xff]
    %v299 = vld [vmem:[#allocation5 + $0x820] sm:$0xff]
    %v300 = vld [vmem:[#allocation5 + $0x828] sm:$0xff]
    %v301 = vld [vmem:[#allocation5 + $0x830] sm:$0xff]
    %v302 = vld [vmem:[#allocation5 + $0x838] sm:$0xff]
    %v303 = vld [vmem:[#allocation5 + $0x840] sm:$0xff]
    %v304 = vld [vmem:[#allocation5 + $0x848] sm:$0xff]
    %v305 = vld [vmem:[#allocation5 + $0x850] sm:$0xff]
    %v306 = vld [vmem:[#allocation5 + $0x858] sm:$0xff]
    %v307 = vld [vmem:[#allocation5 + $0x860] sm:$0xff]
    %v308 = vld [vmem:[#allocation5 + $0x868] sm:$0xff]
    %v309 = vld [vmem:[#allocation5 + $0x870] sm:$0xff]
    %v310 = vld [vmem:[#allocation5 + $0x878] sm:$0xff]
    %v311 = vld [vmem:[#allocation5 + $0x880] sm:$0xff]
    %v312 = vld [vmem:[#allocation5 + $0x888] sm:$0xff]
    %v313 = vld [vmem:[#allocation5 + $0x890] sm:$0xff]
    %v314 = vld [vmem:[#allocation5 + $0x898] sm:$0xff]
    %v315 = vld [vmem:[#allocation5 + $0x8a0] sm:$0xff]
    %v316 = vld [vmem:[#allocation5 + $0x8a8] sm:$0xff]
    %v317 = vld [vmem:[#allocation5 + $0x8b0] sm:$0xff]
    %v318 = vld [vmem:[#allocation5 + $0x8b8] sm:$0xff]
    %v319 = vld [vmem:[#allocation5 + $0x8c0] sm:$0xff]
    %v320 = vld [vmem:[#allocation5 + $0x8c8] sm:$0xff]
    %v321 = vld [vmem:[#allocation5 + $0x8d0] sm:$0xff]
    %v322 = vld [vmem:[#allocation5 + $0x8d8] sm:$0xff]
    %v323 = vld [vmem:[#allocation5 + $0x8e0] sm:$0xff]
    %v324 = vld [vmem:[#allocation5 + $0x8e8] sm:$0xff]
    %v325 = vld [vmem:[#allocation5 + $0x8f0] sm:$0xff]
    %v326 = vld [vmem:[#allocation5 + $0x8f8] sm:$0xff]
    %v328 = vunpack.c.l.b16 %v38
    %v329 = vunpack.c.h.b16 %v38
    %v330 = vpack.c.b16 %v328, %v328
    %v331 = vpack.c.b16 %v329, %v329
    %v622 = vunpack.c.l.b16 %v39
    %v623 = vunpack.c.h.b16 %v39
    %v624 = vunpack.c.l.b16 %v40
    %v625 = vunpack.c.h.b16 %v40
    %v626 = vunpack.c.l.b16 %v41
    %v627 = vunpack.c.h.b16 %v41
    %v628 = vunpack.c.l.b16 %v42
    %v629 = vunpack.c.h.b16 %v42
    %v630 = vunpack.c.l.b16 %v43
    %v631 = vunpack.c.h.b16 %v43
    %v632 = vunpack.c.l.b16 %v44
    %v633 = vunpack.c.h.b16 %v44
    %v634 = vunpack.c.l.b16 %v45
    %v635 = vunpack.c.h.b16 %v45
    %v636 = vunpack.c.l.b16 %v46
    %v637 = vunpack.c.h.b16 %v46
    %v638 = vunpack.c.l.b16 %v47
    %v639 = vunpack.c.h.b16 %v47
    %v640 = vunpack.c.l.b16 %v48
    %v641 = vunpack.c.h.b16 %v48
    %v642 = vunpack.c.l.b16 %v49
    %v643 = vunpack.c.h.b16 %v49
    %v644 = vunpack.c.l.b16 %v50
    %v645 = vunpack.c.h.b16 %v50
    %v646 = vunpack.c.l.b16 %v51
    %v647 = vunpack.c.h.b16 %v51
    %v648 = vunpack.c.l.b16 %v52
    %v649 = vunpack.c.h.b16 %v52
    %v650 = vunpack.c.l.b16 %v53
    %v651 = vunpack.c.h.b16 %v53
    %v652 = vunpack.c.l.b16 %v54
    %v653 = vunpack.c.h.b16 %v54
    %v654 = vunpack.c.l.b16 %v55
    %v655 = vunpack.c.h.b16 %v55
    %v656 = vunpack.c.l.b16 %v56
    %v657 = vunpack.c.h.b16 %v56
    %v658 = vunpack.c.l.b16 %v57
    %v659 = vunpack.c.h.b16 %v57
    %v660 = vunpack.c.l.b16 %v58
    %v661 = vunpack.c.h.b16 %v58
    %v662 = vunpack.c.l.b16 %v59
    %v663 = vunpack.c.h.b16 %v59
    %v664 = vunpack.c.l.b16 %v60
    %v665 = vunpack.c.h.b16 %v60
    %v666 = vunpack.c.l.b16 %v61
    %v667 = vunpack.c.h.b16 %v61
    %v668 = vunpack.c.l.b16 %v62
    %v669 = vunpack.c.h.b16 %v62
    %v670 = vunpack.c.l.b16 %v63
    %v671 = vunpack.c.h.b16 %v63
    %v672 = vunpack.c.l.b16 %v64
    %v673 = vunpack.c.h.b16 %v64
    %v674 = vunpack.c.l.b16 %v65
    %v675 = vunpack.c.h.b16 %v65
    %v676 = vunpack.c.l.b16 %v66
    %v677 = vunpack.c.h.b16 %v66
    %v678 = vunpack.c.l.b16 %v67
    %v679 = vunpack.c.h.b16 %v67
    %v680 = vunpack.c.l.b16 %v68
    %v681 = vunpack.c.h.b16 %v68
    %v682 = vunpack.c.l.b16 %v69
    %v683 = vunpack.c.h.b16 %v69
    %v684 = vunpack.c.l.b16 %v70
    %v685 = vunpack.c.h.b16 %v70
    %v686 = vunpack.c.l.b16 %v71
    %v687 = vunpack.c.h.b16 %v71
    %v688 = vunpack.c.l.b16 %v72
    %v689 = vunpack.c.h.b16 %v72
    %v690 = vunpack.c.l.b16 %v73
    %v691 = vunpack.c.h.b16 %v73
    %v692 = vunpack.c.l.b16 %v74
    %v693 = vunpack.c.h.b16 %v74
    %v694 = vunpack.c.l.b16 %v75
    %v695 = vunpack.c.h.b16 %v75
    %v696 = vunpack.c.l.b16 %v76
    %v697 = vunpack.c.h.b16 %v76
    %v698 = vunpack.c.l.b16 %v77
    %v699 = vunpack.c.h.b16 %v77
    %v700 = vunpack.c.l.b16 %v78
    %v701 = vunpack.c.h.b16 %v78
    %v702 = vunpack.c.l.b16 %v79
    %v703 = vunpack.c.h.b16 %v79
    %v704 = vunpack.c.l.b16 %v80
    %v705 = vunpack.c.h.b16 %v80
    %v706 = vunpack.c.l.b16 %v81
    %v707 = vunpack.c.h.b16 %v81
    %v708 = vunpack.c.l.b16 %v82
    %v709 = vunpack.c.h.b16 %v82
    %v710 = vunpack.c.l.b16 %v83
    %v711 = vunpack.c.h.b16 %v83
    %v712 = vunpack.c.l.b16 %v84
    %v713 = vunpack.c.h.b16 %v84
    %v714 = vunpack.c.l.b16 %v85
    %v715 = vunpack.c.h.b16 %v85
    %v716 = vunpack.c.l.b16 %v86
    %v717 = vunpack.c.h.b16 %v86
    %v718 = vunpack.c.l.b16 %v87
    %v719 = vunpack.c.h.b16 %v87
    %v720 = vunpack.c.l.b16 %v88
    %v721 = vunpack.c.h.b16 %v88
    %v722 = vunpack.c.l.b16 %v89
    %v723 = vunpack.c.h.b16 %v89
    %v724 = vunpack.c.l.b16 %v90
    %v725 = vunpack.c.h.b16 %v90
    %v726 = vunpack.c.l.b16 %v91
    %v727 = vunpack.c.h.b16 %v91
    %v728 = vunpack.c.l.b16 %v92
    %v729 = vunpack.c.h.b16 %v92
    %v730 = vunpack.c.l.b16 %v93
    %v731 = vunpack.c.h.b16 %v93
    %v732 = vunpack.c.l.b16 %v94
    %v733 = vunpack.c.h.b16 %v94
    %v734 = vunpack.c.l.b16 %v95
    %v735 = vunpack.c.h.b16 %v95
    %v736 = vunpack.c.l.b16 %v96
    %v737 = vunpack.c.h.b16 %v96
    %v738 = vunpack.c.l.b16 %v97
    %v739 = vunpack.c.h.b16 %v97
    %v740 = vunpack.c.l.b16 %v98
    %v741 = vunpack.c.h.b16 %v98
    %v742 = vunpack.c.l.b16 %v99
    %v743 = vunpack.c.h.b16 %v99
    %v744 = vunpack.c.l.b16 %v100
    %v745 = vunpack.c.h.b16 %v100
    %v746 = vunpack.c.l.b16 %v101
    %v747 = vunpack.c.h.b16 %v101
    %v748 = vunpack.c.l.b16 %v102
    %v749 = vunpack.c.h.b16 %v102
    %v750 = vunpack.c.l.b16 %v103
    %v751 = vunpack.c.h.b16 %v103
    %v752 = vunpack.c.l.b16 %v104
    %v753 = vunpack.c.h.b16 %v104
    %v754 = vunpack.c.l.b16 %v105
    %v755 = vunpack.c.h.b16 %v105
    %v756 = vunpack.c.l.b16 %v106
    %v757 = vunpack.c.h.b16 %v106
    %v758 = vunpack.c.l.b16 %v107
    %v759 = vunpack.c.h.b16 %v107
    %v760 = vunpack.c.l.b16 %v108
    %v761 = vunpack.c.h.b16 %v108
    %v762 = vunpack.c.l.b16 %v109
    %v763 = vunpack.c.h.b16 %v109
    %v764 = vunpack.c.l.b16 %v110
    %v765 = vunpack.c.h.b16 %v110
    %v766 = vunpack.c.l.b16 %v111
    %v767 = vunpack.c.h.b16 %v111
    %v768 = vunpack.c.l.b16 %v112
    %v769 = vunpack.c.h.b16 %v112
    %v770 = vunpack.c.l.b16 %v113
    %v771 = vunpack.c.h.b16 %v113
    %v772 = vunpack.c.l.b16 %v114
    %v773 = vunpack.c.h.b16 %v114
    %v774 = vunpack.c.l.b16 %v115
    %v775 = vunpack.c.h.b16 %v115
    %v776 = vunpack.c.l.b16 %v116
    %v777 = vunpack.c.h.b16 %v116
    %v778 = vunpack.c.l.b16 %v117
    %v779 = vunpack.c.h.b16 %v117
    %v780 = vunpack.c.l.b16 %v118
    %v781 = vunpack.c.h.b16 %v118
    %v782 = vunpack.c.l.b16 %v119
    %v783 = vunpack.c.h.b16 %v119
    %v784 = vunpack.c.l.b16 %v120
    %v785 = vunpack.c.h.b16 %v120
    %v786 = vunpack.c.l.b16 %v121
    %v787 = vunpack.c.h.b16 %v121
    %v788 = vunpack.c.l.b16 %v122
    %v789 = vunpack.c.h.b16 %v122
    %v790 = vunpack.c.l.b16 %v123
    %v791 = vunpack.c.h.b16 %v123
    %v792 = vunpack.c.l.b16 %v124
    %v793 = vunpack.c.h.b16 %v124
    %v794 = vunpack.c.l.b16 %v125
    %v795 = vunpack.c.h.b16 %v125
    %v796 = vunpack.c.l.b16 %v126
    %v797 = vunpack.c.h.b16 %v126
    %v798 = vunpack.c.l.b16 %v127
    %v799 = vunpack.c.h.b16 %v127
    %v800 = vunpack.c.l.b16 %v128
    %v801 = vunpack.c.h.b16 %v128
    %v802 = vunpack.c.l.b16 %v129
    %v803 = vunpack.c.h.b16 %v129
    %v804 = vunpack.c.l.b16 %v130
    %v805 = vunpack.c.h.b16 %v130
    %v806 = vunpack.c.l.b16 %v131
    %v807 = vunpack.c.h.b16 %v131
    %v808 = vunpack.c.l.b16 %v132
    %v809 = vunpack.c.h.b16 %v132
    %v810 = vunpack.c.l.b16 %v133
    %v811 = vunpack.c.h.b16 %v133
    %v812 = vunpack.c.l.b16 %v134
    %v813 = vunpack.c.h.b16 %v134
    %v814 = vunpack.c.l.b16 %v135
    %v815 = vunpack.c.h.b16 %v135
    %v816 = vunpack.c.l.b16 %v136
    %v817 = vunpack.c.h.b16 %v136
    %v818 = vunpack.c.l.b16 %v137
    %v819 = vunpack.c.h.b16 %v137
    %v820 = vunpack.c.l.b16 %v138
    %v821 = vunpack.c.h.b16 %v138
    %v822 = vunpack.c.l.b16 %v139
    %v823 = vunpack.c.h.b16 %v139
    %v824 = vunpack.c.l.b16 %v140
    %v825 = vunpack.c.h.b16 %v140
    %v826 = vunpack.c.l.b16 %v141
    %v827 = vunpack.c.h.b16 %v141
    %v828 = vunpack.c.l.b16 %v142
    %v829 = vunpack.c.h.b16 %v142
    %v830 = vunpack.c.l.b16 %v143
    %v831 = vunpack.c.h.b16 %v143
    %v832 = vunpack.c.l.b16 %v144
    %v833 = vunpack.c.h.b16 %v144
    %v834 = vunpack.c.l.b16 %v145
    %v835 = vunpack.c.h.b16 %v145
    %v836 = vunpack.c.l.b16 %v146
    %v837 = vunpack.c.h.b16 %v146
    %v838 = vunpack.c.l.b16 %v147
    %v839 = vunpack.c.h.b16 %v147
    %v840 = vunpack.c.l.b16 %v148
    %v841 = vunpack.c.h.b16 %v148
    %v842 = vunpack.c.l.b16 %v149
    %v843 = vunpack.c.h.b16 %v149
    %v844 = vunpack.c.l.b16 %v150
    %v845 = vunpack.c.h.b16 %v150
    %v846 = vunpack.c.l.b16 %v151
    %v847 = vunpack.c.h.b16 %v151
    %v848 = vunpack.c.l.b16 %v152
    %v849 = vunpack.c.h.b16 %v152
    %v850 = vunpack.c.l.b16 %v153
    %v851 = vunpack.c.h.b16 %v153
    %v852 = vunpack.c.l.b16 %v154
    %v853 = vunpack.c.h.b16 %v154
    %v854 = vunpack.c.l.b16 %v155
    %v855 = vunpack.c.h.b16 %v155
    %v856 = vunpack.c.l.b16 %v156
    %v857 = vunpack.c.h.b16 %v156
    %v858 = vunpack.c.l.b16 %v157
    %v859 = vunpack.c.h.b16 %v157
    %v860 = vunpack.c.l.b16 %v158
    %v861 = vunpack.c.h.b16 %v158
    %v862 = vunpack.c.l.b16 %v159
    %v863 = vunpack.c.h.b16 %v159
    %v864 = vunpack.c.l.b16 %v160
    %v865 = vunpack.c.h.b16 %v160
    %v866 = vunpack.c.l.b16 %v161
    %v867 = vunpack.c.h.b16 %v161
    %v868 = vunpack.c.l.b16 %v162
    %v869 = vunpack.c.h.b16 %v162
    %v870 = vunpack.c.l.b16 %v163
    %v871 = vunpack.c.h.b16 %v163
    %v872 = vunpack.c.l.b16 %v164
    %v873 = vunpack.c.h.b16 %v164
    %v874 = vunpack.c.l.b16 %v165
    %v875 = vunpack.c.h.b16 %v165
    %v876 = vunpack.c.l.b16 %v166
    %v877 = vunpack.c.h.b16 %v166
    %v878 = vunpack.c.l.b16 %v167
    %v879 = vunpack.c.h.b16 %v167
    %v880 = vunpack.c.l.b16 %v168
    %v881 = vunpack.c.h.b16 %v168
    %v882 = vunpack.c.l.b16 %v169
    %v883 = vunpack.c.h.b16 %v169
    %v884 = vunpack.c.l.b16 %v170
    %v885 = vunpack.c.h.b16 %v170
    %v886 = vunpack.c.l.b16 %v171
    %v887 = vunpack.c.h.b16 %v171
    %v888 = vunpack.c.l.b16 %v172
    %v889 = vunpack.c.h.b16 %v172
    %v890 = vunpack.c.l.b16 %v173
    %v891 = vunpack.c.h.b16 %v173
    %v892 = vunpack.c.l.b16 %v174
    %v893 = vunpack.c.h.b16 %v174
    %v894 = vunpack.c.l.b16 %v175
    %v895 = vunpack.c.h.b16 %v175
    %v896 = vunpack.c.l.b16 %v176
    %v897 = vunpack.c.h.b16 %v176
    %v898 = vunpack.c.l.b16 %v177
    %v899 = vunpack.c.h.b16 %v177
    %v900 = vunpack.c.l.b16 %v178
    %v901 = vunpack.c.h.b16 %v178
    %v902 = vunpack.c.l.b16 %v179
    %v903 = vunpack.c.h.b16 %v179
    %v904 = vunpack.c.l.b16 %v180
    %v905 = vunpack.c.h.b16 %v180
    %v906 = vunpack.c.l.b16 %v181
    %v907 = vunpack.c.h.b16 %v181
    %v908 = vunpack.c.l.b16 %v182
    %v909 = vunpack.c.h.b16 %v182
    %v910 = vunpack.c.l.b16 %v183
    %v911 = vunpack.c.h.b16 %v183
    %v912 = vunpack.c.l.b16 %v184
    %v913 = vunpack.c.h.b16 %v184
    %v914 = vunpack.c.l.b16 %v185
    %v915 = vunpack.c.h.b16 %v185
    %v916 = vunpack.c.l.b16 %v186
    %v917 = vunpack.c.h.b16 %v186
    %v918 = vunpack.c.l.b16 %v187
    %v919 = vunpack.c.h.b16 %v187
    %v920 = vunpack.c.l.b16 %v188
    %v921 = vunpack.c.h.b16 %v188
    %v922 = vunpack.c.l.b16 %v189
    %v923 = vunpack.c.h.b16 %v189
    %v924 = vunpack.c.l.b16 %v190
    %v925 = vunpack.c.h.b16 %v190
    %v926 = vunpack.c.l.b16 %v191
    %v927 = vunpack.c.h.b16 %v191
    %v928 = vunpack.c.l.b16 %v192
    %v929 = vunpack.c.h.b16 %v192
    %v930 = vunpack.c.l.b16 %v193
    %v931 = vunpack.c.h.b16 %v193
    %v932 = vunpack.c.l.b16 %v194
    %v933 = vunpack.c.h.b16 %v194
    %v934 = vunpack.c.l.b16 %v195
    %v935 = vunpack.c.h.b16 %v195
    %v936 = vunpack.c.l.b16 %v196
    %v937 = vunpack.c.h.b16 %v196
    %v938 = vunpack.c.l.b16 %v197
    %v939 = vunpack.c.h.b16 %v197
    %v940 = vunpack.c.l.b16 %v198
    %v941 = vunpack.c.h.b16 %v198
    %v942 = vunpack.c.l.b16 %v199
    %v943 = vunpack.c.h.b16 %v199
    %v944 = vunpack.c.l.b16 %v200
    %v945 = vunpack.c.h.b16 %v200
    %v946 = vunpack.c.l.b16 %v201
    %v947 = vunpack.c.h.b16 %v201
    %v948 = vunpack.c.l.b16 %v202
    %v949 = vunpack.c.h.b16 %v202
    %v950 = vunpack.c.l.b16 %v203
    %v951 = vunpack.c.h.b16 %v203
    %v952 = vunpack.c.l.b16 %v204
    %v953 = vunpack.c.h.b16 %v204
    %v954 = vunpack.c.l.b16 %v205
    %v955 = vunpack.c.h.b16 %v205
    %v956 = vunpack.c.l.b16 %v206
    %v957 = vunpack.c.h.b16 %v206
    %v958 = vunpack.c.l.b16 %v207
    %v959 = vunpack.c.h.b16 %v207
    %v960 = vunpack.c.l.b16 %v208
    %v961 = vunpack.c.h.b16 %v208
    %v962 = vunpack.c.l.b16 %v209
    %v963 = vunpack.c.h.b16 %v209
    %v964 = vunpack.c.l.b16 %v210
    %v965 = vunpack.c.h.b16 %v210
    %v966 = vunpack.c.l.b16 %v211
    %v967 = vunpack.c.h.b16 %v211
    %v968 = vunpack.c.l.b16 %v212
    %v969 = vunpack.c.h.b16 %v212
    %v970 = vunpack.c.l.b16 %v213
    %v971 = vunpack.c.h.b16 %v213
    %v972 = vunpack.c.l.b16 %v214
    %v973 = vunpack.c.h.b16 %v214
    %v974 = vunpack.c.l.b16 %v215
    %v975 = vunpack.c.h.b16 %v215
    %v976 = vunpack.c.l.b16 %v216
    %v977 = vunpack.c.h.b16 %v216
    %v978 = vunpack.c.l.b16 %v217
    %v979 = vunpack.c.h.b16 %v217
    %v980 = vunpack.c.l.b16 %v218
    %v981 = vunpack.c.h.b16 %v218
    %v982 = vunpack.c.l.b16 %v219
    %v983 = vunpack.c.h.b16 %v219
    %v984 = vunpack.c.l.b16 %v220
    %v985 = vunpack.c.h.b16 %v220
    %v986 = vunpack.c.l.b16 %v221
    %v987 = vunpack.c.h.b16 %v221
    %v988 = vunpack.c.l.b16 %v222
    %v989 = vunpack.c.h.b16 %v222
    %v990 = vunpack.c.l.b16 %v223
    %v991 = vunpack.c.h.b16 %v223
    %v992 = vunpack.c.l.b16 %v224
    %v993 = vunpack.c.h.b16 %v224
    %v994 = vunpack.c.l.b16 %v225
    %v995 = vunpack.c.h.b16 %v225
    %v996 = vunpack.c.l.b16 %v226
    %v997 = vunpack.c.h.b16 %v226
    %v998 = vunpack.c.l.b16 %v227
    %v999 = vunpack.c.h.b16 %v227
    %v1000 = vunpack.c.l.b16 %v228
    %v1001 = vunpack.c.h.b16 %v228
    %v1002 = vunpack.c.l.b16 %v229
    %v1003 = vunpack.c.h.b16 %v229
    %v1004 = vunpack.c.l.b16 %v230
    %v1005 = vunpack.c.h.b16 %v230
    %v1006 = vunpack.c.l.b16 %v231
    %v1007 = vunpack.c.h.b16 %v231
    %v1008 = vunpack.c.l.b16 %v232
    %v1009 = vunpack.c.h.b16 %v232
    %v1010 = vunpack.c.l.b16 %v233
    %v1011 = vunpack.c.h.b16 %v233
    %v1012 = vunpack.c.l.b16 %v234
    %v1013 = vunpack.c.h.b16 %v234
    %v1014 = vunpack.c.l.b16 %v235
    %v1015 = vunpack.c.h.b16 %v235
    %v1016 = vunpack.c.l.b16 %v236
    %v1017 = vunpack.c.h.b16 %v236
    %v1018 = vunpack.c.l.b16 %v237
    %v1019 = vunpack.c.h.b16 %v237
    %v1020 = vunpack.c.l.b16 %v238
    %v1021 = vunpack.c.h.b16 %v238
    %v1022 = vunpack.c.l.b16 %v239
    %v1023 = vunpack.c.h.b16 %v239
    %v1024 = vunpack.c.l.b16 %v240
    %v1025 = vunpack.c.h.b16 %v240
    %v1026 = vunpack.c.l.b16 %v241
    %v1027 = vunpack.c.h.b16 %v241
    %v1028 = vunpack.c.l.b16 %v242
    %v1029 = vunpack.c.h.b16 %v242
    %v1030 = vunpack.c.l.b16 %v243
    %v1031 = vunpack.c.h.b16 %v243
    %v1032 = vunpack.c.l.b16 %v244
    %v1033 = vunpack.c.h.b16 %v244
    %v1034 = vunpack.c.l.b16 %v245
    %v1035 = vunpack.c.h.b16 %v245
    %v1036 = vunpack.c.l.b16 %v246
    %v1037 = vunpack.c.h.b16 %v246
    %v1038 = vunpack.c.l.b16 %v247
    %v1039 = vunpack.c.h.b16 %v247
    %v1040 = vunpack.c.l.b16 %v248
    %v1041 = vunpack.c.h.b16 %v248
    %v1042 = vunpack.c.l.b16 %v249
    %v1043 = vunpack.c.h.b16 %v249
    %v1044 = vunpack.c.l.b16 %v250
    %v1045 = vunpack.c.h.b16 %v250
    %v1046 = vunpack.c.l.b16 %v251
    %v1047 = vunpack.c.h.b16 %v251
    %v1048 = vunpack.c.l.b16 %v252
    %v1049 = vunpack.c.h.b16 %v252
    %v1050 = vunpack.c.l.b16 %v253
    %v1051 = vunpack.c.h.b16 %v253
    %v1052 = vunpack.c.l.b16 %v254
    %v1053 = vunpack.c.h.b16 %v254
    %v1054 = vunpack.c.l.b16 %v255
    %v1055 = vunpack.c.h.b16 %v255
    %v1056 = vunpack.c.l.b16 %v256
    %v1057 = vunpack.c.h.b16 %v256
    %v1058 = vunpack.c.l.b16 %v257
    %v1059 = vunpack.c.h.b16 %v257
    %v1060 = vunpack.c.l.b16 %v258
    %v1061 = vunpack.c.h.b16 %v258
    %v1062 = vunpack.c.l.b16 %v259
    %v1063 = vunpack.c.h.b16 %v259
    %v1064 = vunpack.c.l.b16 %v260
    %v1065 = vunpack.c.h.b16 %v260
    %v1066 = vunpack.c.l.b16 %v261
    %v1067 = vunpack.c.h.b16 %v261
    %v1068 = vunpack.c.l.b16 %v262
    %v1069 = vunpack.c.h.b16 %v262
    %v1070 = vunpack.c.l.b16 %v263
    %v1071 = vunpack.c.h.b16 %v263
    %v1072 = vunpack.c.l.b16 %v264
    %v1073 = vunpack.c.h.b16 %v264
    %v1074 = vunpack.c.l.b16 %v265
    %v1075 = vunpack.c.h.b16 %v265
    %v1076 = vunpack.c.l.b16 %v266
    %v1077 = vunpack.c.h.b16 %v266
    %v1078 = vunpack.c.l.b16 %v267
    %v1079 = vunpack.c.h.b16 %v267
    %v1080 = vunpack.c.l.b16 %v268
    %v1081 = vunpack.c.h.b16 %v268
    %v1082 = vunpack.c.l.b16 %v269
    %v1083 = vunpack.c.h.b16 %v269
    %v1084 = vunpack.c.l.b16 %v270
    %v1085 = vunpack.c.h.b16 %v270
    %v1086 = vunpack.c.l.b16 %v271
    %v1087 = vunpack.c.h.b16 %v271
    %v1088 = vunpack.c.l.b16 %v272
    %v1089 = vunpack.c.h.b16 %v272
    %v1090 = vunpack.c.l.b16 %v273
    %v1091 = vunpack.c.h.b16 %v273
    %v1092 = vunpack.c.l.b16 %v274
    %v1093 = vunpack.c.h.b16 %v274
    %v1094 = vunpack.c.l.b16 %v275
    %v1095 = vunpack.c.h.b16 %v275
    %v1096 = vunpack.c.l.b16 %v276
    %v1097 = vunpack.c.h.b16 %v276
    %v1098 = vunpack.c.l.b16 %v277
    %v1099 = vunpack.c.h.b16 %v277
    %v1100 = vunpack.c.l.b16 %v278
    %v1101 = vunpack.c.h.b16 %v278
    %v1102 = vunpack.c.l.b16 %v279
    %v1103 = vunpack.c.h.b16 %v279
    %v1104 = vunpack.c.l.b16 %v280
    %v1105 = vunpack.c.h.b16 %v280
    %v1106 = vunpack.c.l.b16 %v281
    %v1107 = vunpack.c.h.b16 %v281
    %v1108 = vunpack.c.l.b16 %v282
    %v1109 = vunpack.c.h.b16 %v282
    %v1110 = vunpack.c.l.b16 %v283
    %v1111 = vunpack.c.h.b16 %v283
    %v1112 = vunpack.c.l.b16 %v284
    %v1113 = vunpack.c.h.b16 %v284
    %v1114 = vunpack.c.l.b16 %v285
    %v1115 = vunpack.c.h.b16 %v285
    %v1116 = vunpack.c.l.b16 %v286
    %v1117 = vunpack.c.h.b16 %v286
    %v1118 = vunpack.c.l.b16 %v287
    %v1119 = vunpack.c.h.b16 %v287
    %v1120 = vunpack.c.l.b16 %v288
    %v1121 = vunpack.c.h.b16 %v288
    %v1122 = vunpack.c.l.b16 %v289
    %v1123 = vunpack.c.h.b16 %v289
    %v1124 = vunpack.c.l.b16 %v290
    %v1125 = vunpack.c.h.b16 %v290
    %v1126 = vunpack.c.l.b16 %v291
    %v1127 = vunpack.c.h.b16 %v291
    %v1128 = vunpack.c.l.b16 %v292
    %v1129 = vunpack.c.h.b16 %v292
    %v1130 = vunpack.c.l.b16 %v293
    %v1131 = vunpack.c.h.b16 %v293
    %v1132 = vunpack.c.l.b16 %v294
    %v1133 = vunpack.c.h.b16 %v294
    %v1134 = vunpack.c.l.b16 %v295
    %v1135 = vunpack.c.h.b16 %v295
    %v1136 = vunpack.c.l.b16 %v296
    %v1137 = vunpack.c.h.b16 %v296
    %v1138 = vunpack.c.l.b16 %v297
    %v1139 = vunpack.c.h.b16 %v297
    %v1140 = vunpack.c.l.b16 %v298
    %v1141 = vunpack.c.h.b16 %v298
    %v1142 = vunpack.c.l.b16 %v299
    %v1143 = vunpack.c.h.b16 %v299
    %v1144 = vunpack.c.l.b16 %v300
    %v1145 = vunpack.c.h.b16 %v300
    %v1146 = vunpack.c.l.b16 %v301
    %v1147 = vunpack.c.h.b16 %v301
    %v1148 = vunpack.c.l.b16 %v302
    %v1149 = vunpack.c.h.b16 %v302
    %v1150 = vunpack.c.l.b16 %v303
    %v1151 = vunpack.c.h.b16 %v303
    %v1152 = vunpack.c.l.b16 %v304
    %v1153 = vunpack.c.h.b16 %v304
    %v1154 = vunpack.c.l.b16 %v305
    %v1155 = vunpack.c.h.b16 %v305
    %v1156 = vunpack.c.l.b16 %v306
    %v1157 = vunpack.c.h.b16 %v306
    %v1158 = vunpack.c.l.b16 %v307
    %v1159 = vunpack.c.h.b16 %v307
    %v1160 = vunpack.c.l.b16 %v308
    %v1161 = vunpack.c.h.b16 %v308
    %v1162 = vunpack.c.l.b16 %v309
    %v1163 = vunpack.c.h.b16 %v309
    %v1164 = vunpack.c.l.b16 %v310
    %v1165 = vunpack.c.h.b16 %v310
    %v1166 = vunpack.c.l.b16 %v311
    %v1167 = vunpack.c.h.b16 %v311
    %v1168 = vunpack.c.l.b16 %v312
    %v1169 = vunpack.c.h.b16 %v312
    %v1170 = vunpack.c.l.b16 %v313
    %v1171 = vunpack.c.h.b16 %v313
    %v1172 = vunpack.c.l.b16 %v314
    %v1173 = vunpack.c.h.b16 %v314
    %v1174 = vunpack.c.l.b16 %v315
    %v1175 = vunpack.c.h.b16 %v315
    %v1176 = vunpack.c.l.b16 %v316
    %v1177 = vunpack.c.h.b16 %v316
    %v1178 = vunpack.c.l.b16 %v317
    %v1179 = vunpack.c.h.b16 %v317
    %v1180 = vunpack.c.l.b16 %v318
    %v1181 = vunpack.c.h.b16 %v318
    %v1182 = vunpack.c.l.b16 %v319
    %v1183 = vunpack.c.h.b16 %v319
    %v1184 = vunpack.c.l.b16 %v320
    %v1185 = vunpack.c.h.b16 %v320
    %v1186 = vunpack.c.l.b16 %v321
    %v1187 = vunpack.c.h.b16 %v321
    %v1188 = vunpack.c.l.b16 %v322
    %v1189 = vunpack.c.h.b16 %v322
    %v1190 = vunpack.c.l.b16 %v323
    %v1191 = vunpack.c.h.b16 %v323
    %v1192 = vunpack.c.l.b16 %v324
    %v1193 = vunpack.c.h.b16 %v324
    %v1194 = vunpack.c.l.b16 %v325
    %v1195 = vunpack.c.h.b16 %v325
    %v1196 = vunpack.c.l.b16 %v326
    %v1197 = vunpack.c.h.b16 %v326
    %v1198 = vpack.c.b16 %v640, %v622
    %v1199 = vpack.c.b16 %v641, %v623
    %v1200 = vpack.c.b16 %v642, %v624
    %v1201 = vpack.c.b16 %v643, %v625
    %v1202 = vpack.c.b16 %v644, %v626
    %v1203 = vpack.c.b16 %v645, %v627
    %v1204 = vpack.c.b16 %v646, %v628
    %v1205 = vpack.c.b16 %v647, %v629
    %v1206 = vpack.c.b16 %v648, %v630
    %v1207 = vpack.c.b16 %v649, %v631
    %v1208 = vpack.c.b16 %v650, %v632
    %v1209 = vpack.c.b16 %v651, %v633
    %v1210 = vpack.c.b16 %v652, %v634
    %v1211 = vpack.c.b16 %v653, %v635
    %v1212 = vpack.c.b16 %v654, %v636
    %v1213 = vpack.c.b16 %v655, %v637
    %v1214 = vpack.c.b16 %v656, %v638
    %v1215 = vpack.c.b16 %v657, %v639
    %v1216 = vpack.c.b16 %v676, %v658
    %v1217 = vpack.c.b16 %v677, %v659
    %v1218 = vpack.c.b16 %v678, %v660
    %v1219 = vpack.c.b16 %v679, %v661
    %v1220 = vpack.c.b16 %v680, %v662
    %v1221 = vpack.c.b16 %v681, %v663
    %v1222 = vpack.c.b16 %v682, %v664
    %v1223 = vpack.c.b16 %v683, %v665
    %v1224 = vpack.c.b16 %v684, %v666
    %v1225 = vpack.c.b16 %v685, %v667
    %v1226 = vpack.c.b16 %v686, %v668
    %v1227 = vpack.c.b16 %v687, %v669
    %v1228 = vpack.c.b16 %v688, %v670
    %v1229 = vpack.c.b16 %v689, %v671
    %v1230 = vpack.c.b16 %v690, %v672
    %v1231 = vpack.c.b16 %v691, %v673
    %v1232 = vpack.c.b16 %v692, %v674
    %v1233 = vpack.c.b16 %v693, %v675
    %v1234 = vpack.c.b16 %v712, %v694
    %v1235 = vpack.c.b16 %v713, %v695
    %v1236 = vpack.c.b16 %v714, %v696
    %v1237 = vpack.c.b16 %v715, %v697
    %v1238 = vpack.c.b16 %v716, %v698
    %v1239 = vpack.c.b16 %v717, %v699
    %v1240 = vpack.c.b16 %v718, %v700
    %v1241 = vpack.c.b16 %v719, %v701
    %v1242 = vpack.c.b16 %v720, %v702
    %v1243 = vpack.c.b16 %v721, %v703
    %v1244 = vpack.c.b16 %v722, %v704
    %v1245 = vpack.c.b16 %v723, %v705
    %v1246 = vpack.c.b16 %v724, %v706
    %v1247 = vpack.c.b16 %v725, %v707
    %v1248 = vpack.c.b16 %v726, %v708
    %v1249 = vpack.c.b16 %v727, %v709
    %v1250 = vpack.c.b16 %v728, %v710
    %v1251 = vpack.c.b16 %v729, %v711
    %v1252 = vpack.c.b16 %v748, %v730
    %v1253 = vpack.c.b16 %v749, %v731
    %v1254 = vpack.c.b16 %v750, %v732
    %v1255 = vpack.c.b16 %v751, %v733
    %v1256 = vpack.c.b16 %v752, %v734
    %v1257 = vpack.c.b16 %v753, %v735
    %v1258 = vpack.c.b16 %v754, %v736
    %v1259 = vpack.c.b16 %v755, %v737
    %v1260 = vpack.c.b16 %v756, %v738
    %v1261 = vpack.c.b16 %v757, %v739
    %v1262 = vpack.c.b16 %v758, %v740
    %v1263 = vpack.c.b16 %v759, %v741
    %v1264 = vpack.c.b16 %v760, %v742
    %v1265 = vpack.c.b16 %v761, %v743
    %v1266 = vpack.c.b16 %v762, %v744
    %v1267 = vpack.c.b16 %v763, %v745
    %v1268 = vpack.c.b16 %v764, %v746
    %v1269 = vpack.c.b16 %v765, %v747
    %v1270 = vpack.c.b16 %v784, %v766
    %v1271 = vpack.c.b16 %v785, %v767
    %v1272 = vpack.c.b16 %v786, %v768
    %v1273 = vpack.c.b16 %v787, %v769
    %v1274 = vpack.c.b16 %v788, %v770
    %v1275 = vpack.c.b16 %v789, %v771
    %v1276 = vpack.c.b16 %v790, %v772
    %v1277 = vpack.c.b16 %v791, %v773
    %v1278 = vpack.c.b16 %v792, %v774
    %v1279 = vpack.c.b16 %v793, %v775
    %v1280 = vpack.c.b16 %v794, %v776
    %v1281 = vpack.c.b16 %v795, %v777
    %v1282 = vpack.c.b16 %v796, %v778
    %v1283 = vpack.c.b16 %v797, %v779
    %v1284 = vpack.c.b16 %v798, %v780
    %v1285 = vpack.c.b16 %v799, %v781
    %v1286 = vpack.c.b16 %v800, %v782
    %v1287 = vpack.c.b16 %v801, %v783
    %v1288 = vpack.c.b16 %v820, %v802
    %v1289 = vpack.c.b16 %v821, %v803
    %v1290 = vpack.c.b16 %v822, %v804
    %v1291 = vpack.c.b16 %v823, %v805
    %v1292 = vpack.c.b16 %v824, %v806
    %v1293 = vpack.c.b16 %v825, %v807
    %v1294 = vpack.c.b16 %v826, %v808
    %v1295 = vpack.c.b16 %v827, %v809
    %v1296 = vpack.c.b16 %v828, %v810
    %v1297 = vpack.c.b16 %v829, %v811
    %v1298 = vpack.c.b16 %v830, %v812
    %v1299 = vpack.c.b16 %v831, %v813
    %v1300 = vpack.c.b16 %v832, %v814
    %v1301 = vpack.c.b16 %v833, %v815
    %v1302 = vpack.c.b16 %v834, %v816
    %v1303 = vpack.c.b16 %v835, %v817
    %v1304 = vpack.c.b16 %v836, %v818
    %v1305 = vpack.c.b16 %v837, %v819
    %v1306 = vpack.c.b16 %v856, %v838
    %v1307 = vpack.c.b16 %v857, %v839
    %v1308 = vpack.c.b16 %v858, %v840
    %v1309 = vpack.c.b16 %v859, %v841
    %v1310 = vpack.c.b16 %v860, %v842
    %v1311 = vpack.c.b16 %v861, %v843
    %v1312 = vpack.c.b16 %v862, %v844
    %v1313 = vpack.c.b16 %v863, %v845
    %v1314 = vpack.c.b16 %v864, %v846
    %v1315 = vpack.c.b16 %v865, %v847
    %v1316 = vpack.c.b16 %v866, %v848
    %v1317 = vpack.c.b16 %v867, %v849
    %v1318 = vpack.c.b16 %v868, %v850
    %v1319 = vpack.c.b16 %v869, %v851
    %v1320 = vpack.c.b16 %v870, %v852
    %v1321 = vpack.c.b16 %v871, %v853
    %v1322 = vpack.c.b16 %v872, %v854
    %v1323 = vpack.c.b16 %v873, %v855
    %v1324 = vpack.c.b16 %v892, %v874
    %v1325 = vpack.c.b16 %v893, %v875
    %v1326 = vpack.c.b16 %v894, %v876
    %v1327 = vpack.c.b16 %v895, %v877
    %v1328 = vpack.c.b16 %v896, %v878
    %v1329 = vpack.c.b16 %v897, %v879
    %v1330 = vpack.c.b16 %v898, %v880
    %v1331 = vpack.c.b16 %v899, %v881
    %v1332 = vpack.c.b16 %v900, %v882
    %v1333 = vpack.c.b16 %v901, %v883
    %v1334 = vpack.c.b16 %v902, %v884
    %v1335 = vpack.c.b16 %v903, %v885
    %v1336 = vpack.c.b16 %v904, %v886
    %v1337 = vpack.c.b16 %v905, %v887
    %v1338 = vpack.c.b16 %v906, %v888
    %v1339 = vpack.c.b16 %v907, %v889
    %v1340 = vpack.c.b16 %v908, %v890
    %v1341 = vpack.c.b16 %v909, %v891
    %v1342 = vpack.c.b16 %v928, %v910
    %v1343 = vpack.c.b16 %v929, %v911
    %v1344 = vpack.c.b16 %v930, %v912
    %v1345 = vpack.c.b16 %v931, %v913
    %v1346 = vpack.c.b16 %v932, %v914
    %v1347 = vpack.c.b16 %v933, %v915
    %v1348 = vpack.c.b16 %v934, %v916
    %v1349 = vpack.c.b16 %v935, %v917
    %v1350 = vpack.c.b16 %v936, %v918
    %v1351 = vpack.c.b16 %v937, %v919
    %v1352 = vpack.c.b16 %v938, %v920
    %v1353 = vpack.c.b16 %v939, %v921
    %v1354 = vpack.c.b16 %v940, %v922
    %v1355 = vpack.c.b16 %v941, %v923
    %v1356 = vpack.c.b16 %v942, %v924
    %v1357 = vpack.c.b16 %v943, %v925
    %v1358 = vpack.c.b16 %v944, %v926
    %v1359 = vpack.c.b16 %v945, %v927
    %v1360 = vpack.c.b16 %v964, %v946
    %v1361 = vpack.c.b16 %v965, %v947
    %v1362 = vpack.c.b16 %v966, %v948
    %v1363 = vpack.c.b16 %v967, %v949
    %v1364 = vpack.c.b16 %v968, %v950
    %v1365 = vpack.c.b16 %v969, %v951
    %v1366 = vpack.c.b16 %v970, %v952
    %v1367 = vpack.c.b16 %v971, %v953
    %v1368 = vpack.c.b16 %v972, %v954
    %v1369 = vpack.c.b16 %v973, %v955
    %v1370 = vpack.c.b16 %v974, %v956
    %v1371 = vpack.c.b16 %v975, %v957
    %v1372 = vpack.c.b16 %v976, %v958
    %v1373 = vpack.c.b16 %v977, %v959
    %v1374 = vpack.c.b16 %v978, %v960
    %v1375 = vpack.c.b16 %v979, %v961
    %v1376 = vpack.c.b16 %v980, %v962
    %v1377 = vpack.c.b16 %v981, %v963
    %v1378 = vpack.c.b16 %v1000, %v982
    %v1379 = vpack.c.b16 %v1001, %v983
    %v1380 = vpack.c.b16 %v1002, %v984
    %v1381 = vpack.c.b16 %v1003, %v985
    %v1382 = vpack.c.b16 %v1004, %v986
    %v1383 = vpack.c.b16 %v1005, %v987
    %v1384 = vpack.c.b16 %v1006, %v988
    %v1385 = vpack.c.b16 %v1007, %v989
    %v1386 = vpack.c.b16 %v1008, %v990
    %v1387 = vpack.c.b16 %v1009, %v991
    %v1388 = vpack.c.b16 %v1010, %v992
    %v1389 = vpack.c.b16 %v1011, %v993
    %v1390 = vpack.c.b16 %v1012, %v994
    %v1391 = vpack.c.b16 %v1013, %v995
    %v1392 = vpack.c.b16 %v1014, %v996
    %v1393 = vpack.c.b16 %v1015, %v997
    %v1394 = vpack.c.b16 %v1016, %v998
    %v1395 = vpack.c.b16 %v1017, %v999
    %v1396 = vpack.c.b16 %v1036, %v1018
    %v1397 = vpack.c.b16 %v1037, %v1019
    %v1398 = vpack.c.b16 %v1038, %v1020
    %v1399 = vpack.c.b16 %v1039, %v1021
    %v1400 = vpack.c.b16 %v1040, %v1022
    %v1401 = vpack.c.b16 %v1041, %v1023
    %v1402 = vpack.c.b16 %v1042, %v1024
    %v1403 = vpack.c.b16 %v1043, %v1025
    %v1404 = vpack.c.b16 %v1044, %v1026
    %v1405 = vpack.c.b16 %v1045, %v1027
    %v1406 = vpack.c.b16 %v1046, %v1028
    %v1407 = vpack.c.b16 %v1047, %v1029
    %v1408 = vpack.c.b16 %v1048, %v1030
    %v1409 = vpack.c.b16 %v1049, %v1031
    %v1410 = vpack.c.b16 %v1050, %v1032
    %v1411 = vpack.c.b16 %v1051, %v1033
    %v1412 = vpack.c.b16 %v1052, %v1034
    %v1413 = vpack.c.b16 %v1053, %v1035
    %v1414 = vpack.c.b16 %v1072, %v1054
    %v1415 = vpack.c.b16 %v1073, %v1055
    %v1416 = vpack.c.b16 %v1074, %v1056
    %v1417 = vpack.c.b16 %v1075, %v1057
    %v1418 = vpack.c.b16 %v1076, %v1058
    %v1419 = vpack.c.b16 %v1077, %v1059
    %v1420 = vpack.c.b16 %v1078, %v1060
    %v1421 = vpack.c.b16 %v1079, %v1061
    %v1422 = vpack.c.b16 %v1080, %v1062
    %v1423 = vpack.c.b16 %v1081, %v1063
    %v1424 = vpack.c.b16 %v1082, %v1064
    %v1425 = vpack.c.b16 %v1083, %v1065
    %v1426 = vpack.c.b16 %v1084, %v1066
    %v1427 = vpack.c.b16 %v1085, %v1067
    %v1428 = vpack.c.b16 %v1086, %v1068
    %v1429 = vpack.c.b16 %v1087, %v1069
    %v1430 = vpack.c.b16 %v1088, %v1070
    %v1431 = vpack.c.b16 %v1089, %v1071
    %v1432 = vpack.c.b16 %v1108, %v1090
    %v1433 = vpack.c.b16 %v1109, %v1091
    %v1434 = vpack.c.b16 %v1110, %v1092
    %v1435 = vpack.c.b16 %v1111, %v1093
    %v1436 = vpack.c.b16 %v1112, %v1094
    %v1437 = vpack.c.b16 %v1113, %v1095
    %v1438 = vpack.c.b16 %v1114, %v1096
    %v1439 = vpack.c.b16 %v1115, %v1097
    %v1440 = vpack.c.b16 %v1116, %v1098
    %v1441 = vpack.c.b16 %v1117, %v1099
    %v1442 = vpack.c.b16 %v1118, %v1100
    %v1443 = vpack.c.b16 %v1119, %v1101
    %v1444 = vpack.c.b16 %v1120, %v1102
    %v1445 = vpack.c.b16 %v1121, %v1103
    %v1446 = vpack.c.b16 %v1122, %v1104
    %v1447 = vpack.c.b16 %v1123, %v1105
    %v1448 = vpack.c.b16 %v1124, %v1106
    %v1449 = vpack.c.b16 %v1125, %v1107
    %v1450 = vpack.c.b16 %v1144, %v1126
    %v1451 = vpack.c.b16 %v1145, %v1127
    %v1452 = vpack.c.b16 %v1146, %v1128
    %v1453 = vpack.c.b16 %v1147, %v1129
    %v1454 = vpack.c.b16 %v1148, %v1130
    %v1455 = vpack.c.b16 %v1149, %v1131
    %v1456 = vpack.c.b16 %v1150, %v1132
    %v1457 = vpack.c.b16 %v1151, %v1133
    %v1458 = vpack.c.b16 %v1152, %v1134
    %v1459 = vpack.c.b16 %v1153, %v1135
    %v1460 = vpack.c.b16 %v1154, %v1136
    %v1461 = vpack.c.b16 %v1155, %v1137
    %v1462 = vpack.c.b16 %v1156, %v1138
    %v1463 = vpack.c.b16 %v1157, %v1139
    %v1464 = vpack.c.b16 %v1158, %v1140
    %v1465 = vpack.c.b16 %v1159, %v1141
    %v1466 = vpack.c.b16 %v1160, %v1142
    %v1467 = vpack.c.b16 %v1161, %v1143
    %v1468 = vpack.c.b16 %v1180, %v1162
    %v1469 = vpack.c.b16 %v1181, %v1163
    %v1470 = vpack.c.b16 %v1182, %v1164
    %v1471 = vpack.c.b16 %v1183, %v1165
    %v1472 = vpack.c.b16 %v1184, %v1166
    %v1473 = vpack.c.b16 %v1185, %v1167
    %v1474 = vpack.c.b16 %v1186, %v1168
    %v1475 = vpack.c.b16 %v1187, %v1169
    %v1476 = vpack.c.b16 %v1188, %v1170
    %v1477 = vpack.c.b16 %v1189, %v1171
    %v1478 = vpack.c.b16 %v1190, %v1172
    %v1479 = vpack.c.b16 %v1191, %v1173
    %v1480 = vpack.c.b16 %v1192, %v1174
    %v1481 = vpack.c.b16 %v1193, %v1175
    %v1482 = vpack.c.b16 %v1194, %v1176
    %v1483 = vpack.c.b16 %v1195, %v1177
    %v1484 = vpack.c.b16 %v1196, %v1178
    %v1485 = vpack.c.b16 %v1197, %v1179
    %1774 = vmatprep.subr.bf16.mxu0 %v1199
    %1775 = vmatpush1.bf16.msra.mxu0 %v1198
    %1776 = vmatprep.subr.bf16.mxu0 %v1217
    %1777 = vmatpush1.bf16.msra.mxu0 %v1216
    %1778 = vmatprep.subr.bf16.mxu0 %v1235
    %1779 = vmatpush1.bf16.msra.mxu0 %v1234
    %1780 = vmatprep.subr.bf16.mxu0 %v1253
    %1781 = vmatpush1.bf16.msra.mxu0 %v1252
    %1782 = vmatprep.subr.bf16.mxu0 %v1271
    %1783 = vmatpush1.bf16.msra.mxu0 %v1270
    %1784 = vmatprep.subr.bf16.mxu0 %v1289
    %1785 = vmatpush1.bf16.msra.mxu0 %v1288
    %1786 = vmatprep.subr.bf16.mxu0 %v1307
    %1787 = vmatpush1.bf16.msra.mxu0 %v1306
    %1788 = vmatprep.subr.bf16.mxu0 %v1325
    %1789 = vmatpush1.bf16.msra.mxu0 %v1324
    %1790 = vmatprep.subr.bf16.mxu0 %v1343
    %1791 = vmatpush1.bf16.msra.mxu0 %v1342
    %1792 = vmatprep.subr.bf16.mxu0 %v1361
    %1793 = vmatpush1.bf16.msra.mxu0 %v1360
    %1794 = vmatprep.subr.bf16.mxu0 %v1379
    %1795 = vmatpush1.bf16.msra.mxu0 %v1378
    %1796 = vmatprep.subr.bf16.mxu0 %v1397
    %1797 = vmatpush1.bf16.msra.mxu0 %v1396
    %1798 = vmatprep.subr.bf16.mxu0 %v1415
    %1799 = vmatpush1.bf16.msra.mxu0 %v1414
    %1800 = vmatprep.subr.bf16.mxu0 %v1433
    %1801 = vmatpush1.bf16.msra.mxu0 %v1432
    %1802 = vmatprep.subr.bf16.mxu0 %v1451
    %1803 = vmatpush1.bf16.msra.mxu0 %v1450
    %1804 = vmatprep.subr.bf16.mxu0 %v1469
    %1805 = vmatpush1.bf16.msra.mxu0 %v1468
    %1806 = vmatprep.mubr.bf16.mxu0 %v331
    %1807 = vmatmul.mubr.bf16.gmra.mrb[0].mxu0 %v330
    %v1808 = vpop.f32.mrb[0].mxu0
    %v1809 = vadd.f32 0.0, %v1808
    %v1810 = vpop.f32.mrb[0].mxu0
    %v1811 = vadd.f32 0.0, %v1810
    %v1812 = vpop.f32.mrb[0].mxu0
    %v1813 = vpop.f32.mrb[0].mxu0
    %1814 = vdwg.mxu0
    %1815 = vmatprep.subr.bf16.mxu0 %v1201
    %1816 = vmatpush1.bf16.msra.mxu0 %v1200
    %1817 = vmatprep.subr.bf16.mxu0 %v1219
    %1818 = vmatpush1.bf16.msra.mxu0 %v1218
    %1819 = vmatprep.subr.bf16.mxu0 %v1237
    %1820 = vmatpush1.bf16.msra.mxu0 %v1236
    %1821 = vmatprep.subr.bf16.mxu0 %v1255
    %1822 = vmatpush1.bf16.msra.mxu0 %v1254
    %1823 = vmatprep.subr.bf16.mxu0 %v1273
    %1824 = vmatpush1.bf16.msra.mxu0 %v1272
    %1825 = vmatprep.subr.bf16.mxu0 %v1291
    %1826 = vmatpush1.bf16.msra.mxu0 %v1290
    %1827 = vmatprep.subr.bf16.mxu0 %v1309
    %1828 = vmatpush1.bf16.msra.mxu0 %v1308
    %1829 = vmatprep.subr.bf16.mxu0 %v1327
    %1830 = vmatpush1.bf16.msra.mxu0 %v1326
    %1831 = vmatprep.subr.bf16.mxu0 %v1345
    %1832 = vmatpush1.bf16.msra.mxu0 %v1344
    %1833 = vmatprep.subr.bf16.mxu0 %v1363
    %1834 = vmatpush1.bf16.msra.mxu0 %v1362
    %1835 = vmatprep.subr.bf16.mxu0 %v1381
    %1836 = vmatpush1.bf16.msra.mxu0 %v1380
    %1837 = vmatprep.subr.bf16.mxu0 %v1399
    %1838 = vmatpush1.bf16.msra.mxu0 %v1398
    %1839 = vmatprep.subr.bf16.mxu0 %v1417
    %1840 = vmatpush1.bf16.msra.mxu0 %v1416
    %1841 = vmatprep.subr.bf16.mxu0 %v1435
    %1842 = vmatpush1.bf16.msra.mxu0 %v1434
    %1843 = vmatprep.subr.bf16.mxu0 %v1453
    %1844 = vmatpush1.bf16.msra.mxu0 %v1452
    %1845 = vmatprep.subr.bf16.mxu0 %v1471
    %1846 = vmatpush1.bf16.msra.mxu0 %v1470
    %1847 = vmatprep.mubr.bf16.mxu0 %v331
    %1848 = vmatmul.mubr.bf16.gmra.mrb[0].mxu0 %v330
    %v1849 = vpop.f32.mrb[0].mxu0
    %v1850 = vadd.f32 0.0, %v1849
    %v1851 = vpop.f32.mrb[0].mxu0
    %v1852 = vadd.f32 0.0, %v1851
    %v1853 = vpop.f32.mrb[0].mxu0
    %v1854 = vpop.f32.mrb[0].mxu0
    %1855 = vdwg.mxu0
    %1856 = vmatprep.subr.bf16.mxu0 %v1203
    %1857 = vmatpush1.bf16.msra.mxu0 %v1202
    %1858 = vmatprep.subr.bf16.mxu0 %v1221
    %1859 = vmatpush1.bf16.msra.mxu0 %v1220
    %1860 = vmatprep.subr.bf16.mxu0 %v1239
    %1861 = vmatpush1.bf16.msra.mxu0 %v1238
    %1862 = vmatprep.subr.bf16.mxu0 %v1257
    %1863 = vmatpush1.bf16.msra.mxu0 %v1256
    %1864 = vmatprep.subr.bf16.mxu0 %v1275
    %1865 = vmatpush1.bf16.msra.mxu0 %v1274
    %1866 = vmatprep.subr.bf16.mxu0 %v1293
    %1867 = vmatpush1.bf16.msra.mxu0 %v1292
    %1868 = vmatprep.subr.bf16.mxu0 %v1311
    %1869 = vmatpush1.bf16.msra.mxu0 %v1310
    %1870 = vmatprep.subr.bf16.mxu0 %v1329
    %1871 = vmatpush1.bf16.msra.mxu0 %v1328
    %1872 = vmatprep.subr.bf16.mxu0 %v1347
    %1873 = vmatpush1.bf16.msra.mxu0 %v1346
    %1874 = vmatprep.subr.bf16.mxu0 %v1365
    %1875 = vmatpush1.bf16.msra.mxu0 %v1364
    %1876 = vmatprep.subr.bf16.mxu0 %v1383
    %1877 = vmatpush1.bf16.msra.mxu0 %v1382
    %1878 = vmatprep.subr.bf16.mxu0 %v1401
    %1879 = vmatpush1.bf16.msra.mxu0 %v1400
    %1880 = vmatprep.subr.bf16.mxu0 %v1419
    %1881 = vmatpush1.bf16.msra.mxu0 %v1418
    %1882 = vmatprep.subr.bf16.mxu0 %v1437
    %1883 = vmatpush1.bf16.msra.mxu0 %v1436
    %1884 = vmatprep.subr.bf16.mxu0 %v1455
    %1885 = vmatpush1.bf16.msra.mxu0 %v1454
    %1886 = vmatprep.subr.bf16.mxu0 %v1473
    %1887 = vmatpush1.bf16.msra.mxu0 %v1472
    %1888 = vmatprep.mubr.bf16.mxu0 %v331
    %1889 = vmatmul.mubr.bf16.gmra.mrb[0].mxu0 %v330
    %v1890 = vpop.f32.mrb[0].mxu0
    %v1891 = vadd.f32 0.0, %v1890
    %v1892 = vpop.f32.mrb[0].mxu0
    %v1893 = vadd.f32 0.0, %v1892
    %v1894 = vpop.f32.mrb[0].mxu0
    %v1895 = vpop.f32.mrb[0].mxu0
    %1896 = vdwg.mxu0
    %1897 = vmatprep.subr.bf16.mxu0 %v1205
    %1898 = vmatpush1.bf16.msra.mxu0 %v1204
    %1899 = vmatprep.subr.bf16.mxu0 %v1223
    %1900 = vmatpush1.bf16.msra.mxu0 %v1222
    %1901 = vmatprep.subr.bf16.mxu0 %v1241
    %1902 = vmatpush1.bf16.msra.mxu0 %v1240
    %1903 = vmatprep.subr.bf16.mxu0 %v1259
    %1904 = vmatpush1.bf16.msra.mxu0 %v1258
    %1905 = vmatprep.subr.bf16.mxu0 %v1277
    %1906 = vmatpush1.bf16.msra.mxu0 %v1276
    %1907 = vmatprep.subr.bf16.mxu0 %v1295
    %1908 = vmatpush1.bf16.msra.mxu0 %v1294
    %1909 = vmatprep.subr.bf16.mxu0 %v1313
    %1910 = vmatpush1.bf16.msra.mxu0 %v1312
    %1911 = vmatprep.subr.bf16.mxu0 %v1331
    %1912 = vmatpush1.bf16.msra.mxu0 %v1330
    %1913 = vmatprep.subr.bf16.mxu0 %v1349
    %1914 = vmatpush1.bf16.msra.mxu0 %v1348
    %1915 = vmatprep.subr.bf16.mxu0 %v1367
    %1916 = vmatpush1.bf16.msra.mxu0 %v1366
    %1917 = vmatprep.subr.bf16.mxu0 %v1385
    %1918 = vmatpush1.bf16.msra.mxu0 %v1384
    %1919 = vmatprep.subr.bf16.mxu0 %v1403
    %1920 = vmatpush1.bf16.msra.mxu0 %v1402
    %1921 = vmatprep.subr.bf16.mxu0 %v1421
    %1922 = vmatpush1.bf16.msra.mxu0 %v1420
    %1923 = vmatprep.subr.bf16.mxu0 %v1439
    %1924 = vmatpush1.bf16.msra.mxu0 %v1438
    %1925 = vmatprep.subr.bf16.mxu0 %v1457
    %1926 = vmatpush1.bf16.msra.mxu0 %v1456
    %1927 = vmatprep.subr.bf16.mxu0 %v1475
    %1928 = vmatpush1.bf16.msra.mxu0 %v1474
    %1929 = vmatprep.mubr.bf16.mxu0 %v331
    %1930 = vmatmul.mubr.bf16.gmra.mrb[0].mxu0 %v330
    %v1931 = vpop.f32.mrb[0].mxu0
    %v1932 = vadd.f32 0.0, %v1931
    %v1933 = vpop.f32.mrb[0].mxu0
    %v1934 = vadd.f32 0.0, %v1933
    %v1935 = vpop.f32.mrb[0].mxu0
    %v1936 = vpop.f32.mrb[0].mxu0
    %1937 = vdwg.mxu0
    %1938 = vmatprep.subr.bf16.mxu0 %v1207
    %1939 = vmatpush1.bf16.msra.mxu0 %v1206
    %1940 = vmatprep.subr.bf16.mxu0 %v1225
    %1941 = vmatpush1.bf16.msra.mxu0 %v1224
    %1942 = vmatprep.subr.bf16.mxu0 %v1243
    %1943 = vmatpush1.bf16.msra.mxu0 %v1242
    %1944 = vmatprep.subr.bf16.mxu0 %v1261
    %1945 = vmatpush1.bf16.msra.mxu0 %v1260
    %1946 = vmatprep.subr.bf16.mxu0 %v1279
    %1947 = vmatpush1.bf16.msra.mxu0 %v1278
    %1948 = vmatprep.subr.bf16.mxu0 %v1297
    %1949 = vmatpush1.bf16.msra.mxu0 %v1296
    %1950 = vmatprep.subr.bf16.mxu0 %v1315
    %1951 = vmatpush1.bf16.msra.mxu0 %v1314
    %1952 = vmatprep.subr.bf16.mxu0 %v1333
    %1953 = vmatpush1.bf16.msra.mxu0 %v1332
    %1954 = vmatprep.subr.bf16.mxu0 %v1351
    %1955 = vmatpush1.bf16.msra.mxu0 %v1350
    %1956 = vmatprep.subr.bf16.mxu0 %v1369
    %1957 = vmatpush1.bf16.msra.mxu0 %v1368
    %1958 = vmatprep.subr.bf16.mxu0 %v1387
    %1959 = vmatpush1.bf16.msra.mxu0 %v1386
    %1960 = vmatprep.subr.bf16.mxu0 %v1405
    %1961 = vmatpush1.bf16.msra.mxu0 %v1404
    %1962 = vmatprep.subr.bf16.mxu0 %v1423
    %1963 = vmatpush1.bf16.msra.mxu0 %v1422
    %1964 = vmatprep.subr.bf16.mxu0 %v1441
    %1965 = vmatpush1.bf16.msra.mxu0 %v1440
    %1966 = vmatprep.subr.bf16.mxu0 %v1459
    %1967 = vmatpush1.bf16.msra.mxu0 %v1458
    %1968 = vmatprep.subr.bf16.mxu0 %v1477
    %1969 = vmatpush1.bf16.msra.mxu0 %v1476
    %1970 = vmatprep.mubr.bf16.mxu0 %v331
    %1971 = vmatmul.mubr.bf16.gmra.mrb[0].mxu0 %v330
    %v1972 = vpop.f32.mrb[0].mxu0
    %v1973 = vadd.f32 0.0, %v1972
    %v1974 = vpop.f32.mrb[0].mxu0
    %v1975 = vadd.f32 0.0, %v1974
    %v1976 = vpop.f32.mrb[0].mxu0
    %v1977 = vpop.f32.mrb[0].mxu0
    %1978 = vdwg.mxu0
    %1979 = vmatprep.subr.bf16.mxu0 %v1209
    %1980 = vmatpush1.bf16.msra.mxu0 %v1208
    %1981 = vmatprep.subr.bf16.mxu0 %v1227
    %1982 = vmatpush1.bf16.msra.mxu0 %v1226
    %1983 = vmatprep.subr.bf16.mxu0 %v1245
    %1984 = vmatpush1.bf16.msra.mxu0 %v1244
    %1985 = vmatprep.subr.bf16.mxu0 %v1263
    %1986 = vmatpush1.bf16.msra.mxu0 %v1262
    %1987 = vmatprep.subr.bf16.mxu0 %v1281
    %1988 = vmatpush1.bf16.msra.mxu0 %v1280
    %1989 = vmatprep.subr.bf16.mxu0 %v1299
    %1990 = vmatpush1.bf16.msra.mxu0 %v1298
    %1991 = vmatprep.subr.bf16.mxu0 %v1317
    %1992 = vmatpush1.bf16.msra.mxu0 %v1316
    %1993 = vmatprep.subr.bf16.mxu0 %v1335
    %1994 = vmatpush1.bf16.msra.mxu0 %v1334
    %1995 = vmatprep.subr.bf16.mxu0 %v1353
    %1996 = vmatpush1.bf16.msra.mxu0 %v1352
    %1997 = vmatprep.subr.bf16.mxu0 %v1371
    %1998 = vmatpush1.bf16.msra.mxu0 %v1370
    %1999 = vmatprep.subr.bf16.mxu0 %v1389
    %2000 = vmatpush1.bf16.msra.mxu0 %v1388
    %2001 = vmatprep.subr.bf16.mxu0 %v1407
    %2002 = vmatpush1.bf16.msra.mxu0 %v1406
    %2003 = vmatprep.subr.bf16.mxu0 %v1425
    %2004 = vmatpush1.bf16.msra.mxu0 %v1424
    %2005 = vmatprep.subr.bf16.mxu0 %v1443
    %2006 = vmatpush1.bf16.msra.mxu0 %v1442
    %2007 = vmatprep.subr.bf16.mxu0 %v1461
    %2008 = vmatpush1.bf16.msra.mxu0 %v1460
    %2009 = vmatprep.subr.bf16.mxu0 %v1479
    %2010 = vmatpush1.bf16.msra.mxu0 %v1478
    %2011 = vmatprep.mubr.bf16.mxu0 %v331
    %2012 = vmatmul.mubr.bf16.gmra.mrb[0].mxu0 %v330
    %v2013 = vpop.f32.mrb[0].mxu0
    %v2014 = vadd.f32 0.0, %v2013
    %v2015 = vpop.f32.mrb[0].mxu0
    %v2016 = vadd.f32 0.0, %v2015
    %v2017 = vpop.f32.mrb[0].mxu0
    %v2018 = vpop.f32.mrb[0].mxu0
    %2019 = vdwg.mxu0
    %2020 = vmatprep.subr.bf16.mxu0 %v1211
    %2021 = vmatpush1.bf16.msra.mxu0 %v1210
    %2022 = vmatprep.subr.bf16.mxu0 %v1229
    %2023 = vmatpush1.bf16.msra.mxu0 %v1228
    %2024 = vmatprep.subr.bf16.mxu0 %v1247
    %2025 = vmatpush1.bf16.msra.mxu0 %v1246
    %2026 = vmatprep.subr.bf16.mxu0 %v1265
    %2027 = vmatpush1.bf16.msra.mxu0 %v1264
    %2028 = vmatprep.subr.bf16.mxu0 %v1283
    %2029 = vmatpush1.bf16.msra.mxu0 %v1282
    %2030 = vmatprep.subr.bf16.mxu0 %v1301
    %2031 = vmatpush1.bf16.msra.mxu0 %v1300
    %2032 = vmatprep.subr.bf16.mxu0 %v1319
    %2033 = vmatpush1.bf16.msra.mxu0 %v1318
    %2034 = vmatprep.subr.bf16.mxu0 %v1337
    %2035 = vmatpush1.bf16.msra.mxu0 %v1336
    %2036 = vmatprep.subr.bf16.mxu0 %v1355
    %2037 = vmatpush1.bf16.msra.mxu0 %v1354
    %2038 = vmatprep.subr.bf16.mxu0 %v1373
    %2039 = vmatpush1.bf16.msra.mxu0 %v1372
    %2040 = vmatprep.subr.bf16.mxu0 %v1391
    %2041 = vmatpush1.bf16.msra.mxu0 %v1390
    %2042 = vmatprep.subr.bf16.mxu0 %v1409
    %2043 = vmatpush1.bf16.msra.mxu0 %v1408
    %2044 = vmatprep.subr.bf16.mxu0 %v1427
    %2045 = vmatpush1.bf16.msra.mxu0 %v1426
    %2046 = vmatprep.subr.bf16.mxu0 %v1445
    %2047 = vmatpush1.bf16.msra.mxu0 %v1444
    %2048 = vmatprep.subr.bf16.mxu0 %v1463
    %2049 = vmatpush1.bf16.msra.mxu0 %v1462
    %2050 = vmatprep.subr.bf16.mxu0 %v1481
    %2051 = vmatpush1.bf16.msra.mxu0 %v1480
    %2052 = vmatprep.mubr.bf16.mxu0 %v331
    %2053 = vmatmul.mubr.bf16.gmra.mrb[0].mxu0 %v330
    %v2054 = vpop.f32.mrb[0].mxu0
    %v2055 = vadd.f32 0.0, %v2054
    %v2056 = vpop.f32.mrb[0].mxu0
    %v2057 = vadd.f32 0.0, %v2056
    %v2058 = vpop.f32.mrb[0].mxu0
    %v2059 = vpop.f32.mrb[0].mxu0
    %2060 = vdwg.mxu0
    %2061 = vmatprep.subr.bf16.mxu0 %v1213
    %2062 = vmatpush1.bf16.msra.mxu0 %v1212
    %2063 = vmatprep.subr.bf16.mxu0 %v1231
    %2064 = vmatpush1.bf16.msra.mxu0 %v1230
    %2065 = vmatprep.subr.bf16.mxu0 %v1249
    %2066 = vmatpush1.bf16.msra.mxu0 %v1248
    %2067 = vmatprep.subr.bf16.mxu0 %v1267
    %2068 = vmatpush1.bf16.msra.mxu0 %v1266
    %2069 = vmatprep.subr.bf16.mxu0 %v1285
    %2070 = vmatpush1.bf16.msra.mxu0 %v1284
    %2071 = vmatprep.subr.bf16.mxu0 %v1303
    %2072 = vmatpush1.bf16.msra.mxu0 %v1302
    %2073 = vmatprep.subr.bf16.mxu0 %v1321
    %2074 = vmatpush1.bf16.msra.mxu0 %v1320
    %2075 = vmatprep.subr.bf16.mxu0 %v1339
    %2076 = vmatpush1.bf16.msra.mxu0 %v1338
    %2077 = vmatprep.subr.bf16.mxu0 %v1357
    %2078 = vmatpush1.bf16.msra.mxu0 %v1356
    %2079 = vmatprep.subr.bf16.mxu0 %v1375
    %2080 = vmatpush1.bf16.msra.mxu0 %v1374
    %2081 = vmatprep.subr.bf16.mxu0 %v1393
    %2082 = vmatpush1.bf16.msra.mxu0 %v1392
    %2083 = vmatprep.subr.bf16.mxu0 %v1411
    %2084 = vmatpush1.bf16.msra.mxu0 %v1410
    %2085 = vmatprep.subr.bf16.mxu0 %v1429
    %2086 = vmatpush1.bf16.msra.mxu0 %v1428
    %2087 = vmatprep.subr.bf16.mxu0 %v1447
    %2088 = vmatpush1.bf16.msra.mxu0 %v1446
    %2089 = vmatprep.subr.bf16.mxu0 %v1465
    %2090 = vmatpush1.bf16.msra.mxu0 %v1464
    %2091 = vmatprep.subr.bf16.mxu0 %v1483
    %2092 = vmatpush1.bf16.msra.mxu0 %v1482
    %2093 = vmatprep.mubr.bf16.mxu0 %v331
    %2094 = vmatmul.mubr.bf16.gmra.mrb[0].mxu0 %v330
    %v2095 = vpop.f32.mrb[0].mxu0
    %v2096 = vadd.f32 0.0, %v2095
    %v2097 = vpop.f32.mrb[0].mxu0
    %v2098 = vadd.f32 0.0, %v2097
    %v2099 = vpop.f32.mrb[0].mxu0
    %v2100 = vpop.f32.mrb[0].mxu0
    %2101 = vdwg.mxu0
    %2102 = vmatprep.subr.bf16.mxu0 %v1215
    %2103 = vmatpush1.bf16.msra.mxu0 %v1214
    %2104 = vmatprep.subr.bf16.mxu0 %v1233
    %2105 = vmatpush1.bf16.msra.mxu0 %v1232
    %2106 = vmatprep.subr.bf16.mxu0 %v1251
    %2107 = vmatpush1.bf16.msra.mxu0 %v1250
    %2108 = vmatprep.subr.bf16.mxu0 %v1269
    %2109 = vmatpush1.bf16.msra.mxu0 %v1268
    %2110 = vmatprep.subr.bf16.mxu0 %v1287
    %2111 = vmatpush1.bf16.msra.mxu0 %v1286
    %2112 = vmatprep.subr.bf16.mxu0 %v1305
    %2113 = vmatpush1.bf16.msra.mxu0 %v1304
    %2114 = vmatprep.subr.bf16.mxu0 %v1323
    %2115 = vmatpush1.bf16.msra.mxu0 %v1322
    %2116 = vmatprep.subr.bf16.mxu0 %v1341
    %2117 = vmatpush1.bf16.msra.mxu0 %v1340
    %2118 = vmatprep.subr.bf16.mxu0 %v1359
    %2119 = vmatpush1.bf16.msra.mxu0 %v1358
    %2120 = vmatprep.subr.bf16.mxu0 %v1377
    %2121 = vmatpush1.bf16.msra.mxu0 %v1376
    %2122 = vmatprep.subr.bf16.mxu0 %v1395
    %2123 = vmatpush1.bf16.msra.mxu0 %v1394
    %2124 = vmatprep.subr.bf16.mxu0 %v1413
    %2125 = vmatpush1.bf16.msra.mxu0 %v1412
    %2126 = vmatprep.subr.bf16.mxu0 %v1431
    %2127 = vmatpush1.bf16.msra.mxu0 %v1430
    %2128 = vmatprep.subr.bf16.mxu0 %v1449
    %2129 = vmatpush1.bf16.msra.mxu0 %v1448
    %2130 = vmatprep.subr.bf16.mxu0 %v1467
    %2131 = vmatpush1.bf16.msra.mxu0 %v1466
    %2132 = vmatprep.subr.bf16.mxu0 %v1485
    %2133 = vmatpush1.bf16.msra.mxu0 %v1484
    %2134 = vmatprep.mubr.bf16.mxu0 %v331
    %2135 = vmatmul.mubr.bf16.gmra.mrb[0].mxu0 %v330
    %v2136 = vpop.f32.mrb[0].mxu0
    %v2137 = vadd.f32 0.0, %v2136
    %v2138 = vpop.f32.mrb[0].mxu0
    %v2139 = vadd.f32 0.0, %v2138
    %v2140 = vpop.f32.mrb[0].mxu0
    %v2141 = vpop.f32.mrb[0].mxu0
    %2142 = vdwg.mxu0
    %v2143 = vmax.f32 %v1809, %v1850
    %v2144 = vmax.f32 %v1811, %v1852
    %v2145 = vmax.f32 %v2143, %v1891
    %v2146 = vmax.f32 %v2144, %v1893
    %v2147 = vmax.f32 %v2145, %v1932
    %v2148 = vmax.f32 %v2146, %v1934
    %v2149 = vmax.f32 %v2147, %v1973
    %v2150 = vmax.f32 %v2148, %v1975
    %v2151 = vmax.f32 %v2149, %v2014
    %v2152 = vmax.f32 %v2150, %v2016
    %v2153 = vmax.f32 %v2151, %v2055
    %v2154 = vmax.f32 %v2152, %v2057
    %v2155 = vmax.f32 %v2153, %v2096
    %v2156 = vmax.f32 %v2154, %v2098
    %v2157 = vmax.f32 %v2155, %v2137
    %v2158 = vmax.f32 %v2156, %v2139
    %2159 = vst [vmem:[#allocation7] sm:$0xff] %v2157
    %2160 = vst [vmem:[#allocation7 + $0x8] sm:$0xff] %v2158
    // Predicated region
    $region18: #{tpu_custom_call.1} parent=1 // pred_check
      _
    $region19: #{tpu_custom_call.1} parent=1 // pred_check_branch
      %2162 = sbr.rel (0) target = $region21
    $region20: #{tpu_custom_call.1} parent=1 // pred_region
      %s2164 = ssub.s32 256, 256
      %2165 = vsyncadd [#allocation4], %s2164
      %s2167 = sshll.u32 [#allocation7], 4
      %s2168 = int_to_ptr.vmem [resolvable:$true] %s2167
      %2170 = dma.vmem_to_hbm [thread:$0]  %s2168, 256, %s2, [#allocation4]
    $region21: #{tpu_custom_call.1} parent=1 // pred_fallthru
      _
    // Predicated region
    $region22: #{tpu_custom_call.1} parent=1 // pred_check
      _
    $region23: #{tpu_custom_call.1} parent=1 // pred_check_branch
      %2172 = sbr.rel (0) target = $region25
    $region24: #{tpu_custom_call.1} parent=1 // pred_region
      %2173 = dma.done [#allocation4], 256
    $region25: #{tpu_custom_call.1} parent=1 // pred_fallthru
      _
    %2174 = vsyncpa [#allocation3], 1
    %2175 = vsyncpa [#allocation6], 1
    %2176 = vsyncpa [#allocation4], 1

</llo_original>
